<compile_context>
chip_gen: v5e
topology: v5e:2x2
jax: 0.10.0
libtpu: 0.0.40
codegen_flags: <defaults>
</compile_context>

<pallas_src>
import math
from functools import partial

import jax
import jax.numpy as jnp
from jax import lax
from jax.experimental import pallas as pl
from jax.experimental.pallas import tpu as pltpu

_SQRT_2_OVER_PI = math.sqrt(2.0 / math.pi)


# ---------------------------------------------------------------------------
# In-kernel helpers
# ---------------------------------------------------------------------------
def _gelu_tanh(x):
    # TODO(synk): PyTorch nn.GELU() defaults to the erf form; the tanh
    # approximation (max abs diff ~1e-3) is used since erf has no guaranteed
    # Mosaic lowering.  Reference below uses the same formula.
    return 0.5 * x * (1.0 + jnp.tanh(_SQRT_2_OVER_PI * (x + 0.044715 * x * x * x)))


def _layernorm_ch(y, gamma, beta, eps):
    """LayerNorm over the channel (sublane) axis of a (C, T) tile.

    Channel reductions are done as (1,C)x(C,T) dots so they run on the MXU
    instead of as cross-sublane XLU reductions."""
    c = y.shape[0]
    ones = jnp.ones((1, c), jnp.float32)
    inv_c = 1.0 / c
    mu = jnp.dot(ones, y, preferred_element_type=jnp.float32) * inv_c       # (1, T)
    d = y - mu
    var = jnp.dot(ones, d * d, preferred_element_type=jnp.float32) * inv_c  # (1, T)
    return d * lax.rsqrt(var + eps) * gamma + beta


# ---------------------------------------------------------------------------
# Kernels (channels on sublanes, pixels on lanes)
# ---------------------------------------------------------------------------
def _dcu_proj_kernel(xp_ref, w_ref, b_ref, g_ref, be_ref, cur_ref, *, eps):
    """conv_proj(1x1) + LayerNorm + GELU on a (Cin, T) pooled tile."""
    y = jnp.dot(w_ref[...], xp_ref[0], preferred_element_type=jnp.float32)
    y = y + b_ref[...]
    y = _layernorm_ch(y, g_ref[...], be_ref[...], eps)
    cur_ref[0] = _gelu_tanh(y).astype(cur_ref.dtype)


def _dcu_proj_fuse_kernel(xp_ref, pre_ref, w_ref, b_ref, g_ref, be_ref,
                          wfp_ref, wfc_ref, bf_ref, gf_ref, bef_ref,
                          cur_ref, out_ref, *, eps):
    """conv_proj + LN + GELU, then conv_fusion(cat(pre,cur)) + LN + GELU,
    all on one (channels, T) tile."""
    y = jnp.dot(w_ref[...], xp_ref[0], preferred_element_type=jnp.float32)
    y = y + b_ref[...]
    y = _layernorm_ch(y, g_ref[...], be_ref[...], eps)
    cur = _gelu_tanh(y)                                        # (Cout, T) f32
    cur_ref[0] = cur.astype(cur_ref.dtype)

    # conv_fusion over cat(pre_x, cur_x) == Wf_pre @ pre + Wf_cur @ cur + bf
    z = jnp.dot(wfp_ref[...], pre_ref[0], preferred_element_type=jnp.float32)
    z = z + jnp.dot(wfc_ref[...], cur, preferred_element_type=jnp.float32)
    z = z + bf_ref[...]
    z = _layernorm_ch(z, gf_ref[...], bef_ref[...], eps)
    out_ref[0] = _gelu_tanh(z).astype(out_ref.dtype)


# ---------------------------------------------------------------------------
# pallas_call wrapper (module forward)
# ---------------------------------------------------------------------------
def _pick_tq(hw, cap=1024):
    """Largest multiple-of-128 divisor of hw (<= cap); fall back to full hw."""
    t = (min(hw, cap) // 128) * 128
    while t >= 128:
        if hw % t == 0:
            return t
        t -= 128
    # TODO(synk): masked remainder tiles for ragged HW instead of one full tile.
    return hw


def dcu_down_forward(x, x_t, pre_x, params, dw_stride, eps=1e-6):
    """Pallas forward of DCUDown.

    x: (N, Cin, Hin, Win) NCHW; x_t: (N, S, Cout) token sequence (only the cls
    token x_t[:, 0] is used); pre_x: (N, Cpre, H, W) or None.
    Returns (x_seq (N, 1 + H*W, Cout), cur_x (N, Cout, H, W))."""
    w_proj = params["w_proj"]            # (Cout, Cin)  -- PyTorch conv weight, squeezed
    b_proj = params["b_proj"]            # (Cout, 1)
    g_proj, be_proj = params["g_proj"], params["be_proj"]

    N, Cin, Hin, Win = x.shape
    s = dw_stride
    H, W = Hin // s, Win // s
    HW = H * W
    Cout = w_proj.shape[0]

    # AvgPool2d(k=s, stride=s) commutes with the 1x1 conv -> pool first so the
    # kernel touches s**2 less data.  Free reshape + mean in native NCHW.
    xp = x[:, :, :H * s, :W * s].reshape(N, Cin, H, s, W, s).mean(axis=(3, 5))
    xp = xp.reshape(N, Cin, HW)

    tq = _pick_tq(HW)
    grid = (N, HW // tq)
    cparams = pltpu.CompilerParams(
        dimension_semantics=("parallel", "parallel"))

    def img_spec(c):
        return pl.BlockSpec((1, c, tq), lambda n, t: (n, 0, t))

    def full_spec(shape):
        return pl.BlockSpec(shape, lambda n, t: (0, 0))

    if pre_x is None:
        cur_t = pl.pallas_call(
            partial(_dcu_proj_kernel, eps=eps),
            out_shape=jax.ShapeDtypeStruct((N, Cout, HW), x.dtype),
            grid=grid,
            in_specs=[img_spec(Cin),
                      full_spec(w_proj.shape), full_spec(b_proj.shape),
                      full_spec(g_proj.shape), full_spec(be_proj.shape)],
            out_specs=img_spec(Cout),
            compiler_params=cparams,
        )(xp, w_proj, b_proj, g_proj, be_proj)
        seq_t = cur_t
    else:
        Cpre = pre_x.shape[1]
        pre = pre_x.reshape(N, Cpre, HW)
        w_fuse = params["w_fuse"]                       # (Cout, Cpre + Cout)
        wf_pre, wf_cur = w_fuse[:, :Cpre], w_fuse[:, Cpre:]
        b_fuse, g_fuse, be_fuse = params["b_fuse"], params["g_fuse"], params["be_fuse"]

        cur_t, seq_t = pl.pallas_call(
            partial(_dcu_proj_fuse_kernel, eps=eps),
            out_shape=(jax.ShapeDtypeStruct((N, Cout, HW), x.dtype),
                       jax.ShapeDtypeStruct((N, Cout, HW), x.dtype)),
            grid=grid,
            in_specs=[img_spec(Cin), img_spec(Cpre),
                      full_spec(w_proj.shape), full_spec(b_proj.shape),
                      full_spec(g_proj.shape), full_spec(be_proj.shape),
                      full_spec(wf_pre.shape), full_spec(wf_cur.shape),
                      full_spec(b_fuse.shape), full_spec(g_fuse.shape),
                      full_spec(be_fuse.shape)],
            out_specs=(img_spec(Cout), img_spec(Cout)),
            compiler_params=cparams,
        )(xp, pre, w_proj, b_proj, g_proj, be_proj,
          wf_pre, wf_cur, b_fuse, g_fuse, be_fuse)

    cur_x = cur_t.reshape(N, Cout, H, W)                 # native NCHW, no transpose
    seq = jnp.transpose(seq_t, (0, 2, 1))                # (N, HW, Cout)
    x_out = jnp.concatenate([x_t[:, :1, :], seq], axis=1)
    return x_out, cur_x


# ---------------------------------------------------------------------------
# Pure-JAX reference (PyTorch op order; for correctness check)
# ---------------------------------------------------------------------------
def _layernorm_last(x, gamma, beta, eps):
    mu = jnp.mean(x, axis=-1, keepdims=True)
    var = jnp.mean((x - mu) ** 2, axis=-1, keepdims=True)
    return (x - mu) / jnp.sqrt(var + eps) * gamma + beta


def reference_forward(x, x_t, pre_x, params, dw_stride, eps=1e-6):
    hp = lax.Precision.HIGHEST
    w_proj = params["w_proj"]
    b_proj = params["b_proj"][:, 0]
    g_proj, be_proj = params["g_proj"][:, 0], params["be_proj"][:, 0]

    N, Cin, Hin, Win = x.shape
    s = dw_stride
    Cout = w_proj.shape[0]
    H, W = Hin // s, Win // s

    y = jnp.einsum("nchw,dc->ndhw", x, w_proj, precision=hp)
    y = y + b_proj[None, :, None, None]
    y = y[:, :, :H * s, :W * s].reshape(N, Cout, H, s, W, s).mean(axis=(3, 5))
    seq = y.reshape(N, Cout, H * W).transpose(0, 2, 1)
    seq = _gelu_tanh(_layernorm_last(seq, g_proj, be_proj, eps))
    cur = seq.transpose(0, 2, 1).reshape(N, Cout, H, W)

    if pre_x is not None:
        w_fuse = params["w_fuse"]
        b_fuse = params["b_fuse"][:, 0]
        g_fuse, be_fuse = params["g_fuse"][:, 0], params["be_fuse"][:, 0]
        xf = jnp.concatenate([pre_x, cur], axis=1)
        z = jnp.einsum("nchw,dc->ndhw", xf, w_fuse, precision=hp)
        z = z + b_fuse[None, :, None, None]
        zs = z.reshape(N, Cout, H * W).transpose(0, 2, 1)
        seq = _gelu_tanh(_layernorm_last(zs, g_fuse, be_fuse, eps))

    out = jnp.concatenate([x_t[:, :1, :], seq], axis=1)
    return out, cur


# ---------------------------------------------------------------------------
def make_params(key, inplanes, outplanes, pre_outplanes):
    ks = jax.random.split(key, 8)
    p = {
        "w_proj": 0.1 * jax.random.normal(ks[0], (outplanes, inplanes), jnp.float32),
        "b_proj": 0.1 * jax.random.normal(ks[1], (outplanes, 1), jnp.float32),
        "g_proj": 1.0 + 0.1 * jax.random.normal(ks[2], (outplanes, 1), jnp.float32),
        "be_proj": 0.1 * jax.random.normal(ks[3], (outplanes, 1), jnp.float32),
    }
    if pre_outplanes:
        p.update({
            "w_fuse": 0.1 * jax.random.normal(
                ks[4], (outplanes, pre_outplanes + outplanes), jnp.float32),
            "b_fuse": 0.1 * jax.random.normal(ks[5], (outplanes, 1), jnp.float32),
            "g_fuse": 1.0 + 0.1 * jax.random.normal(ks[6], (outplanes, 1), jnp.float32),
            "be_fuse": 0.1 * jax.random.normal(ks[7], (outplanes, 1), jnp.float32),
        })
    return p


if __name__ == "__main__":
    key = jax.random.PRNGKey(0)
    k_x, k_t, k_pre, k_p, k_p0 = jax.random.split(key, 5)

    N, Cin, Hin, Win = 2, 16, 16, 16
    Cout, Cpre, s = 128, 64, 2
    H, W = Hin // s, Win // s

    x = jax.random.normal(k_x, (N, Cin, Hin, Win), jnp.float32)
    x_t = jax.random.normal(k_t, (N, 1 + H * W, Cout), jnp.float32)
    pre_x = jax.random.normal(k_pre, (N, Cpre, H, W), jnp.float32)

    fwd = jax.jit(partial(dcu_down_forward, dw_stride=s))

    # Fusion path (pre_outplanes != 0)
    params = make_params(k_p, Cin, Cout, Cpre)
    out_seq, cur_x = fwd(x, x_t, pre_x, params)
    out_seq.block_until_ready()
    cur_x.block_until_ready()
    ref_seq, ref_cur = reference_forward(x, x_t, pre_x, params, s)
    assert out_seq.shape == (N, 1 + H * W, Cout)
    assert cur_x.shape == (N, Cout, H, W)
    assert jnp.allclose(out_seq, ref_seq, atol=5e-3, rtol=5e-3), (
        float(jnp.max(jnp.abs(out_seq - ref_seq))))
    assert jnp.allclose(cur_x, ref_cur, atol=5e-3, rtol=5e-3), (
        float(jnp.max(jnp.abs(cur_x - ref_cur))))

    # No-fusion path (pre_outplanes == 0)
    params0 = make_params(k_p0, Cin, Cout, 0)
    out_seq0, cur_x0 = fwd(x, x_t, None, params0)
    out_seq0.block_until_ready()
    cur_x0.block_until_ready()
    ref_seq0, ref_cur0 = reference_forward(x, x_t, None, params0, s)
    assert jnp.allclose(out_seq0, ref_seq0, atol=5e-3, rtol=5e-3), (
        float(jnp.max(jnp.abs(out_seq0 - ref_seq0))))
    assert jnp.allclose(cur_x0, ref_cur0, atol=5e-3, rtol=5e-3), (
        float(jnp.max(jnp.abs(cur_x0 - ref_cur0))))

    print("KERNEL_OK")
</pallas_src>

<mosaic_0001>
module attributes {stable_mosaic.version = 11 : i64} {
  func.func @_dcu_proj_fuse_kernel(%arg0: i32, %arg1: i32, %arg2: memref<1x16x64xf32, #tpu.memory_space<vmem>>, %arg3: memref<1x64x64xf32, #tpu.memory_space<vmem>>, %arg4: memref<128x16xf32, #tpu.memory_space<vmem>>, %arg5: memref<128x1xf32, #tpu.memory_space<vmem>>, %arg6: memref<128x1xf32, #tpu.memory_space<vmem>>, %arg7: memref<128x1xf32, #tpu.memory_space<vmem>>, %arg8: memref<128x64xf32, #tpu.memory_space<vmem>>, %arg9: memref<128x128xf32, #tpu.memory_space<vmem>>, %arg10: memref<128x1xf32, #tpu.memory_space<vmem>>, %arg11: memref<128x1xf32, #tpu.memory_space<vmem>>, %arg12: memref<128x1xf32, #tpu.memory_space<vmem>>, %arg13: memref<1x128x64xf32, #tpu.memory_space<vmem>>, %arg14: memref<1x128x64xf32, #tpu.memory_space<vmem>>) attributes {dimension_semantics = [#tpu.dimension_semantics<parallel>, #tpu.dimension_semantics<parallel>], iteration_bounds = array<i64: 2, 1>, scalar_prefetch = 0 : i64, scratch_operands = 0 : i64, tpu.core_type = #tpu.core_type<tc>, window_params = [{transform_indices = @transform_0, window_bounds = array<i64: 1, 16, 64>}, {transform_indices = @transform_1, window_bounds = array<i64: 1, 64, 64>}, {pipeline_mode = #tpu.pipeline_mode<synchronous>, transform_indices = @transform_2, window_bounds = array<i64: 128, 16>}, {pipeline_mode = #tpu.pipeline_mode<synchronous>, transform_indices = @transform_3, window_bounds = array<i64: 128, 1>}, {pipeline_mode = #tpu.pipeline_mode<synchronous>, transform_indices = @transform_4, window_bounds = array<i64: 128, 1>}, {pipeline_mode = #tpu.pipeline_mode<synchronous>, transform_indices = @transform_5, window_bounds = array<i64: 128, 1>}, {pipeline_mode = #tpu.pipeline_mode<synchronous>, transform_indices = @transform_6, window_bounds = array<i64: 128, 64>}, {pipeline_mode = #tpu.pipeline_mode<synchronous>, transform_indices = @transform_7, window_bounds = array<i64: 128, 128>}, {pipeline_mode = #tpu.pipeline_mode<synchronous>, transform_indices = @transform_8, window_bounds = array<i64: 128, 1>}, {pipeline_mode = #tpu.pipeline_mode<synchronous>, transform_indices = @transform_9, window_bounds = array<i64: 128, 1>}, {pipeline_mode = #tpu.pipeline_mode<synchronous>, transform_indices = @transform_10, window_bounds = array<i64: 128, 1>}, {transform_indices = @transform_11, window_bounds = array<i64: 1, 128, 64>}, {transform_indices = @transform_12, window_bounds = array<i64: 1, 128, 64>}]} {
    %c0 = arith.constant 0 : index
    %c0_0 = arith.constant 0 : index
    %0 = vector.load %arg4[%c0, %c0_0] : memref<128x16xf32, #tpu.memory_space<vmem>>, vector<128x16xf32>
    %c0_1 = arith.constant 0 : index
    %c0_2 = arith.constant 0 : index
    %c0_3 = arith.constant 0 : index
    %1 = vector.load %arg2[%c0_1, %c0_2, %c0_3] : memref<1x16x64xf32, #tpu.memory_space<vmem>>, vector<1x16x64xf32>
    %2 = vector.shape_cast %1 : vector<1x16x64xf32> to vector<16x64xf32>
    %cst = arith.constant dense<0.000000e+00> : vector<128x64xf32>
    %3 = tpu.matmul %0, %2, %cst {dimension_numbers = #tpu.dot_dimension_numbers<[1], [0], [0], [1], [0, 0, 1, 1], [], []>} : vector<128x16xf32>, vector<16x64xf32>, vector<128x64xf32> -> vector<128x64xf32>
    %c0_4 = arith.constant 0 : index
    %c0_5 = arith.constant 0 : index
    %4 = vector.load %arg5[%c0_4, %c0_5] : memref<128x1xf32, #tpu.memory_space<vmem>>, vector<128x1xf32>
    %5 = vector.broadcast %4 : vector<128x1xf32> to vector<128x64xf32>
    %6 = arith.addf %3, %5 : vector<128x64xf32>
    %c0_6 = arith.constant 0 : index
    %c0_7 = arith.constant 0 : index
    %7 = vector.load %arg6[%c0_6, %c0_7] : memref<128x1xf32, #tpu.memory_space<vmem>>, vector<128x1xf32>
    %c0_8 = arith.constant 0 : index
    %c0_9 = arith.constant 0 : index
    %8 = vector.load %arg7[%c0_8, %c0_9] : memref<128x1xf32, #tpu.memory_space<vmem>>, vector<128x1xf32>
    %cst_10 = arith.constant 1.000000e+00 : f32
    %9 = vector.broadcast %cst_10 : f32 to vector<1x128xf32>
    %cst_11 = arith.constant dense<0.000000e+00> : vector<1x64xf32>
    %10 = tpu.matmul %9, %6, %cst_11 {dimension_numbers = #tpu.dot_dimension_numbers<[1], [0], [0], [1], [0, 0, 1, 1], [], []>} : vector<1x128xf32>, vector<128x64xf32>, vector<1x64xf32> -> vector<1x64xf32>
    %cst_12 = arith.constant 7.812500e-03 : f32
    %11 = vector.broadcast %cst_12 : f32 to vector<1x64xf32>
    %12 = arith.mulf %10, %11 : vector<1x64xf32>
    %13 = vector.broadcast %12 : vector<1x64xf32> to vector<128x64xf32>
    %14 = arith.subf %6, %13 : vector<128x64xf32>
    %15 = arith.mulf %14, %14 : vector<128x64xf32>
    %cst_13 = arith.constant dense<0.000000e+00> : vector<1x64xf32>
    %16 = tpu.matmul %9, %15, %cst_13 {dimension_numbers = #tpu.dot_dimension_numbers<[1], [0], [0], [1], [0, 0, 1, 1], [], []>} : vector<1x128xf32>, vector<128x64xf32>, vector<1x64xf32> -> vector<1x64xf32>
    %cst_14 = arith.constant 7.812500e-03 : f32
    %17 = vector.broadcast %cst_14 : f32 to vector<1x64xf32>
    %18 = arith.mulf %16, %17 : vector<1x64xf32>
    %cst_15 = arith.constant 9.99999997E-7 : f32
    %19 = vector.broadcast %cst_15 : f32 to vector<1x64xf32>
    %20 = arith.addf %18, %19 : vector<1x64xf32>
    %21 = math.rsqrt %20 : vector<1x64xf32>
    %22 = vector.broadcast %21 : vector<1x64xf32> to vector<128x64xf32>
    %23 = arith.mulf %14, %22 : vector<128x64xf32>
    %24 = vector.broadcast %7 : vector<128x1xf32> to vector<128x64xf32>
    %25 = arith.mulf %23, %24 : vector<128x64xf32>
    %26 = vector.broadcast %8 : vector<128x1xf32> to vector<128x64xf32>
    %27 = arith.addf %25, %26 : vector<128x64xf32>
    %cst_16 = arith.constant 5.000000e-01 : f32
    %28 = vector.broadcast %cst_16 : f32 to vector<128x64xf32>
    %29 = arith.mulf %28, %27 : vector<128x64xf32>
    %cst_17 = arith.constant 4.471500e-02 : f32
    %30 = vector.broadcast %cst_17 : f32 to vector<128x64xf32>
    %31 = arith.mulf %30, %27 : vector<128x64xf32>
    %32 = arith.mulf %31, %27 : vector<128x64xf32>
    %33 = arith.mulf %32, %27 : vector<128x64xf32>
    %34 = arith.addf %27, %33 : vector<128x64xf32>
    %cst_18 = arith.constant 0.797884583 : f32
    %35 = vector.broadcast %cst_18 : f32 to vector<128x64xf32>
    %36 = arith.mulf %35, %34 : vector<128x64xf32>
    %37 = math.tanh %36 : vector<128x64xf32>
    %cst_19 = arith.constant 1.000000e+00 : f32
    %38 = vector.broadcast %cst_19 : f32 to vector<128x64xf32>
    %39 = arith.addf %38, %37 : vector<128x64xf32>
    %40 = arith.mulf %29, %39 : vector<128x64xf32>
    %c0_20 = arith.constant 0 : index
    %c0_21 = arith.constant 0 : index
    %c0_22 = arith.constant 0 : index
    %41 = vector.load %arg13[%c0_20, %c0_21, %c0_22] : memref<1x128x64xf32, #tpu.memory_space<vmem>>, vector<1x128x64xf32>
    %42 = vector.shape_cast %41 : vector<1x128x64xf32> to vector<128x64xf32>
    %43 = vector.shape_cast %40 : vector<128x64xf32> to vector<1x128x64xf32>
    tpu.vector_store %arg13[%c0_20, %c0_21, %c0_22], %43 {strides = array<i32>} : memref<1x128x64xf32, #tpu.memory_space<vmem>>, vector<1x128x64xf32>,
    %c0_23 = arith.constant 0 : index
    %c0_24 = arith.constant 0 : index
    %44 = vector.load %arg8[%c0_23, %c0_24] : memref<128x64xf32, #tpu.memory_space<vmem>>, vector<128x64xf32>
    %c0_25 = arith.constant 0 : index
    %c0_26 = arith.constant 0 : index
    %c0_27 = arith.constant 0 : index
    %45 = vector.load %arg3[%c0_25, %c0_26, %c0_27] : memref<1x64x64xf32, #tpu.memory_space<vmem>>, vector<1x64x64xf32>
    %46 = vector.shape_cast %45 : vector<1x64x64xf32> to vector<64x64xf32>
    %cst_28 = arith.constant dense<0.000000e+00> : vector<128x64xf32>
    %47 = tpu.matmul %44, %46, %cst_28 {dimension_numbers = #tpu.dot_dimension_numbers<[1], [0], [0], [1], [0, 0, 1, 1], [], []>} : vector<128x64xf32>, vector<64x64xf32>, vector<128x64xf32> -> vector<128x64xf32>
    %c0_29 = arith.constant 0 : index
    %c0_30 = arith.constant 0 : index
    %48 = vector.load %arg9[%c0_29, %c0_30] : memref<128x128xf32, #tpu.memory_space<vmem>>, vector<128x128xf32>
    %cst_31 = arith.constant dense<0.000000e+00> : vector<128x64xf32>
    %49 = tpu.matmul %48, %40, %cst_31 {dimension_numbers = #tpu.dot_dimension_numbers<[1], [0], [0], [1], [0, 0, 1, 1], [], []>} : vector<128x128xf32>, vector<128x64xf32>, vector<128x64xf32> -> vector<128x64xf32>
    %50 = arith.addf %47, %49 : vector<128x64xf32>
    %c0_32 = arith.constant 0 : index
    %c0_33 = arith.constant 0 : index
    %51 = vector.load %arg10[%c0_32, %c0_33] : memref<128x1xf32, #tpu.memory_space<vmem>>, vector<128x1xf32>
    %52 = vector.broadcast %51 : vector<128x1xf32> to vector<128x64xf32>
    %53 = arith.addf %50, %52 : vector<128x64xf32>
    %c0_34 = arith.constant 0 : index
    %c0_35 = arith.constant 0 : index
    %54 = vector.load %arg11[%c0_34, %c0_35] : memref<128x1xf32, #tpu.memory_space<vmem>>, vector<128x1xf32>
    %c0_36 = arith.constant 0 : index
    %c0_37 = arith.constant 0 : index
    %55 = vector.load %arg12[%c0_36, %c0_37] : memref<128x1xf32, #tpu.memory_space<vmem>>, vector<128x1xf32>
    %cst_38 = arith.constant 1.000000e+00 : f32
    %56 = vector.broadcast %cst_38 : f32 to vector<1x128xf32>
    %cst_39 = arith.constant dense<0.000000e+00> : vector<1x64xf32>
    %57 = tpu.matmul %56, %53, %cst_39 {dimension_numbers = #tpu.dot_dimension_numbers<[1], [0], [0], [1], [0, 0, 1, 1], [], []>} : vector<1x128xf32>, vector<128x64xf32>, vector<1x64xf32> -> vector<1x64xf32>
    %cst_40 = arith.constant 7.812500e-03 : f32
    %58 = vector.broadcast %cst_40 : f32 to vector<1x64xf32>
    %59 = arith.mulf %57, %58 : vector<1x64xf32>
    %60 = vector.broadcast %59 : vector<1x64xf32> to vector<128x64xf32>
    %61 = arith.subf %53, %60 : vector<128x64xf32>
    %62 = arith.mulf %61, %61 : vector<128x64xf32>
    %cst_41 = arith.constant dense<0.000000e+00> : vector<1x64xf32>
    %63 = tpu.matmul %56, %62, %cst_41 {dimension_numbers = #tpu.dot_dimension_numbers<[1], [0], [0], [1], [0, 0, 1, 1], [], []>} : vector<1x128xf32>, vector<128x64xf32>, vector<1x64xf32> -> vector<1x64xf32>
    %cst_42 = arith.constant 7.812500e-03 : f32
    %64 = vector.broadcast %cst_42 : f32 to vector<1x64xf32>
    %65 = arith.mulf %63, %64 : vector<1x64xf32>
    %cst_43 = arith.constant 9.99999997E-7 : f32
    %66 = vector.broadcast %cst_43 : f32 to vector<1x64xf32>
    %67 = arith.addf %65, %66 : vector<1x64xf32>
    %68 = math.rsqrt %67 : vector<1x64xf32>
    %69 = vector.broadcast %68 : vector<1x64xf32> to vector<128x64xf32>
    %70 = arith.mulf %61, %69 : vector<128x64xf32>
    %71 = vector.broadcast %54 : vector<128x1xf32> to vector<128x64xf32>
    %72 = arith.mulf %70, %71 : vector<128x64xf32>
    %73 = vector.broadcast %55 : vector<128x1xf32> to vector<128x64xf32>
    %74 = arith.addf %72, %73 : vector<128x64xf32>
    %cst_44 = arith.constant 5.000000e-01 : f32
    %75 = vector.broadcast %cst_44 : f32 to vector<128x64xf32>
    %76 = arith.mulf %75, %74 : vector<128x64xf32>
    %cst_45 = arith.constant 4.471500e-02 : f32
    %77 = vector.broadcast %cst_45 : f32 to vector<128x64xf32>
    %78 = arith.mulf %77, %74 : vector<128x64xf32>
    %79 = arith.mulf %78, %74 : vector<128x64xf32>
    %80 = arith.mulf %79, %74 : vector<128x64xf32>
    %81 = arith.addf %74, %80 : vector<128x64xf32>
    %cst_46 = arith.constant 0.797884583 : f32
    %82 = vector.broadcast %cst_46 : f32 to vector<128x64xf32>
    %83 = arith.mulf %82, %81 : vector<128x64xf32>
    %84 = math.tanh %83 : vector<128x64xf32>
    %cst_47 = arith.constant 1.000000e+00 : f32
    %85 = vector.broadcast %cst_47 : f32 to vector<128x64xf32>
    %86 = arith.addf %85, %84 : vector<128x64xf32>
    %87 = arith.mulf %76, %86 : vector<128x64xf32>
    %c0_48 = arith.constant 0 : index
    %c0_49 = arith.constant 0 : index
    %c0_50 = arith.constant 0 : index
    %88 = vector.load %arg14[%c0_48, %c0_49, %c0_50] : memref<1x128x64xf32, #tpu.memory_space<vmem>>, vector<1x128x64xf32>
    %89 = vector.shape_cast %88 : vector<1x128x64xf32> to vector<128x64xf32>
    %90 = vector.shape_cast %87 : vector<128x64xf32> to vector<1x128x64xf32>
    tpu.vector_store %arg14[%c0_48, %c0_49, %c0_50], %90 {strides = array<i32>} : memref<1x128x64xf32, #tpu.memory_space<vmem>>, vector<1x128x64xf32>,
    return
  }
  func.func @transform_0(%arg0: i32, %arg1: i32) -> (i32, i32, i32) {
    %c0_i32 = arith.constant 0 : i32
    %c0_i32_0 = arith.constant 0 : i32
    return %arg0, %c0_i32, %arg1 : i32, i32, i32
  }
  func.func @transform_1(%arg0: i32, %arg1: i32) -> (i32, i32, i32) {
    %c0_i32 = arith.constant 0 : i32
    %c0_i32_0 = arith.constant 0 : i32
    return %arg0, %c0_i32, %arg1 : i32, i32, i32
  }
  func.func @transform_2(%arg0: i32, %arg1: i32) -> (i32, i32) {
    %c0_i32 = arith.constant 0 : i32
    %c0_i32_0 = arith.constant 0 : i32
    %c0_i32_1 = arith.constant 0 : i32
    return %c0_i32, %c0_i32_0 : i32, i32
  }
  func.func @transform_3(%arg0: i32, %arg1: i32) -> (i32, i32) {
    %c0_i32 = arith.constant 0 : i32
    %c0_i32_0 = arith.constant 0 : i32
    %c0_i32_1 = arith.constant 0 : i32
    return %c0_i32, %c0_i32_0 : i32, i32
  }
  func.func @transform_4(%arg0: i32, %arg1: i32) -> (i32, i32) {
    %c0_i32 = arith.constant 0 : i32
    %c0_i32_0 = arith.constant 0 : i32
    %c0_i32_1 = arith.constant 0 : i32
    return %c0_i32, %c0_i32_0 : i32, i32
  }
  func.func @transform_5(%arg0: i32, %arg1: i32) -> (i32, i32) {
    %c0_i32 = arith.constant 0 : i32
    %c0_i32_0 = arith.constant 0 : i32
    %c0_i32_1 = arith.constant 0 : i32
    return %c0_i32, %c0_i32_0 : i32, i32
  }
  func.func @transform_6(%arg0: i32, %arg1: i32) -> (i32, i32) {
    %c0_i32 = arith.constant 0 : i32
    %c0_i32_0 = arith.constant 0 : i32
    %c0_i32_1 = arith.constant 0 : i32
    return %c0_i32, %c0_i32_0 : i32, i32
  }
  func.func @transform_7(%arg0: i32, %arg1: i32) -> (i32, i32) {
    %c0_i32 = arith.constant 0 : i32
    %c0_i32_0 = arith.constant 0 : i32
    %c0_i32_1 = arith.constant 0 : i32
    return %c0_i32, %c0_i32_0 : i32, i32
  }
  func.func @transform_8(%arg0: i32, %arg1: i32) -> (i32, i32) {
    %c0_i32 = arith.constant 0 : i32
    %c0_i32_0 = arith.constant 0 : i32
    %c0_i32_1 = arith.constant 0 : i32
    return %c0_i32, %c0_i32_0 : i32, i32
  }
  func.func @transform_9(%arg0: i32, %arg1: i32) -> (i32, i32) {
    %c0_i32 = arith.constant 0 : i32
    %c0_i32_0 = arith.constant 0 : i32
    %c0_i32_1 = arith.constant 0 : i32
    return %c0_i32, %c0_i32_0 : i32, i32
  }
  func.func @transform_10(%arg0: i32, %arg1: i32) -> (i32, i32) {
    %c0_i32 = arith.constant 0 : i32
    %c0_i32_0 = arith.constant 0 : i32
    %c0_i32_1 = arith.constant 0 : i32
    return %c0_i32, %c0_i32_0 : i32, i32
  }
  func.func @transform_11(%arg0: i32, %arg1: i32) -> (i32, i32, i32) {
    %c0_i32 = arith.constant 0 : i32
    %c0_i32_0 = arith.constant 0 : i32
    return %arg0, %c0_i32, %arg1 : i32, i32, i32
  }
  func.func @transform_12(%arg0: i32, %arg1: i32) -> (i32, i32, i32) {
    %c0_i32 = arith.constant 0 : i32
    %c0_i32_0 = arith.constant 0 : i32
    return %arg0, %c0_i32, %arg1 : i32, i32, i32
  }
}

</mosaic_0001>

<llo_original>
// kernel: dcu_down_forward.1
$region0: #{dcu_down_forward.1}
  #allocation0 [shape = 'u32[]', space=smem, size = 0x4, offset = 0x4, fixed_abs, tag = 'smem constant byte address 0x4 - core index']
  #allocation1 [shape = 'u32[72,128]{1,0:T(1,128)}', space=vmem, size = 0x9000, scoped, tag = 'internal scratch']
  %s0 = inlined_call_operand.vmem [shape: f32[2,16,64], index: 0, kind: input, shape index: {}]
  %s1 = inlined_call_operand.vmem [shape: f32[2,64,64], index: 1, kind: input, shape index: {}]
  %s2 = inlined_call_operand.vmem [shape: f32[128,16], index: 2, kind: input, shape index: {}]
  %s3 = inlined_call_operand.vmem [shape: f32[128,1], index: 3, kind: input, shape index: {}]
  %s4 = inlined_call_operand.vmem [shape: f32[128,1], index: 4, kind: input, shape index: {}]
  %s5 = inlined_call_operand.vmem [shape: f32[128,1], index: 5, kind: input, shape index: {}]
  %s6 = inlined_call_operand.vmem [shape: f32[128,64], index: 6, kind: input, shape index: {}]
  %s7 = inlined_call_operand.vmem [shape: f32[128,128], index: 7, kind: input, shape index: {}]
  %s8 = inlined_call_operand.vmem [shape: f32[128,1], index: 8, kind: input, shape index: {}]
  %s9 = inlined_call_operand.vmem [shape: f32[128,1], index: 9, kind: input, shape index: {}]
  %s10 = inlined_call_operand.vmem [shape: f32[128,1], index: 10, kind: input, shape index: {}]
  %s11 = inlined_call_operand.vmem [shape: f32[2,128,64], index: 11, kind: output, shape index: {0}]
  %s12 = inlined_call_operand.vmem [shape: f32[2,128,64], index: 12, kind: output, shape index: {1}]
  %13 = xla_tuple %s11, %s12
  %s14 = sld [smem:[#allocation0]]
  $region85: #{dcu_down_forward.1} parent=0
    _
  %s16 = ssub.s32 1, %s14
  %s17 = scalar_select 0, %s16, %s14
  loop: start=0, step=1, limit=4
  $region2: #{dcu_down_forward.1} parent=0 // loop_pre_header
    _
  $region3: #{dcu_down_forward.1} parent=0 // loop_header
    %s19 = sphi 0, %s23
    %p20 = scmp.ge.s32.totalorder %s19, 4
    %s26 = sphi 0, %s38
    %s27 = sphi 0, %s34
    %s28 = sphi 0, %s26
    %s29 = sphi 0, %s27
    %s30 = sphi 0, %s28
    %s31 = sphi 0, %s29
    %s43 = sphi 0, %s45
    %s46 = sphi 0, %s43
    %s47 = sphi 0, %s46
    %s63 = sphi 0, %s47
    %s71 = sphi 0, %s73
    %s74 = sphi 0, %s71
    %s75 = sphi 0, %s74
    %s91 = sphi 0, %s75
    %s95 = sphi 0, %s95
    %s97 = sphi 0, %s95
    %s98 = sphi 0, %s97
    %s112 = sphi 0, %s98
    %s116 = sphi 0, %s116
    %s118 = sphi 0, %s116
    %s119 = sphi 0, %s118
    %s133 = sphi 0, %s119
    %s137 = sphi 0, %s137
    %s139 = sphi 0, %s137
    %s140 = sphi 0, %s139
    %s154 = sphi 0, %s140
    %s158 = sphi 0, %s158
    %s160 = sphi 0, %s158
    %s161 = sphi 0, %s160
    %s175 = sphi 0, %s161
    %s179 = sphi 0, %s179
    %s181 = sphi 0, %s179
    %s182 = sphi 0, %s181
    %s196 = sphi 0, %s182
    %s200 = sphi 0, %s200
    %s202 = sphi 0, %s200
    %s203 = sphi 0, %s202
    %s217 = sphi 0, %s203
    %s221 = sphi 0, %s221
    %s223 = sphi 0, %s221
    %s224 = sphi 0, %s223
    %s238 = sphi 0, %s224
    %s242 = sphi 0, %s242
    %s244 = sphi 0, %s242
    %s245 = sphi 0, %s244
    %s259 = sphi 0, %s245
    %s263 = sphi 0, %s263
    %s265 = sphi 0, %s263
    %s266 = sphi 0, %s265
    %s280 = sphi 0, %s266
    %s288 = sphi 0, %s290
    %s291 = sphi 0, %s288
    %s292 = sphi 0, %s291
    %s308 = sphi 0, %s292
    %s316 = sphi 0, %s318
    %s319 = sphi 0, %s316
    %s320 = sphi 0, %s319
    %s336 = sphi 0, %s320
  $region4: #{dcu_down_forward.1} parent=0 // loop_header_branch
    %22 = sbr.rel (%p20) target = $region8
  $region5: #{dcu_down_forward.1} parent=0 // loop_body
    %s24 = ssub.s32 %s19, 1
    %s25 = ssub.s32 %s19, 2
    %s32 = sadd.s32 1, %s27
    %p33 = scmp.ge.s32.totalorder %s32, 1
    %s34 = scalar_select %p33, 0, %s32
    %s35 = sadd.s32 1, %s26
    %s36 = scalar_select %p33, %s35, %s26
    %p37 = scmp.ge.s32.totalorder %s36, 2
    %s38 = scalar_select %p37, 0, %s36
    %s39 = ssub.s32 %s26, %s38
    %s40 = ssub.s32 %s27, %s34
    %s41 = sor.u32 %s39, %s40
    %p42 = scmp.eq.s32.totalorder %s41, 0
    %s44 = sadd.s32 %s43, 1
    %s45 = scalar_select %p42, %s43, %s44
    %p48 = pneg %p42
    %p49 = scmp.eq.s32.totalorder %s19, 1
    %p50 = por %p48, %p49
    %p51 = scmp.ne.s32.totalorder %s43, %s46
    %p52 = scmp.eq.s32.totalorder %s19, 0
    %p53 = por %p51, %p52
    %p54 = scmp.ne.s32.totalorder %s43, %s46
    %p55 = scmp.eq.s32.totalorder %s24, 1
    %p56 = por %p54, %p55
    %p57 = scmp.ne.s32.totalorder %s46, %s47
    %p58 = scmp.eq.s32.totalorder %s24, 0
    %p59 = por %p57, %p58
    %p60 = scmp.ne.s32.totalorder %s46, %s47
    %p61 = scmp.eq.s32.totalorder %s25, 1
    %p62 = por %p60, %p61
    %p64 = scmp.ne.s32.totalorder %s47, %s63
    %p65 = scmp.eq.s32.totalorder %s25, 0
    %p66 = por %p64, %p65
    %s67 = ssub.s32 %s26, %s38
    %s68 = ssub.s32 %s27, %s34
    %s69 = sor.u32 %s67, %s68
    %p70 = scmp.eq.s32.totalorder %s69, 0
    %s72 = sadd.s32 %s71, 1
    %s73 = scalar_select %p70, %s71, %s72
    %p76 = pneg %p70
    %p77 = scmp.eq.s32.totalorder %s19, 1
    %p78 = por %p76, %p77
    %p79 = scmp.ne.s32.totalorder %s71, %s74
    %p80 = scmp.eq.s32.totalorder %s19, 0
    %p81 = por %p79, %p80
    %p82 = scmp.ne.s32.totalorder %s71, %s74
    %p83 = scmp.eq.s32.totalorder %s24, 1
    %p84 = por %p82, %p83
    %p85 = scmp.ne.s32.totalorder %s74, %s75
    %p86 = scmp.eq.s32.totalorder %s24, 0
    %p87 = por %p85, %p86
    %p88 = scmp.ne.s32.totalorder %s74, %s75
    %p89 = scmp.eq.s32.totalorder %s25, 1
    %p90 = por %p88, %p89
    %p92 = scmp.ne.s32.totalorder %s75, %s91
    %p93 = scmp.eq.s32.totalorder %s25, 0
    %p94 = por %p92, %p93
    %s96 = sadd.s32 %s95, 1
    %p99 = scmp.eq.s32.totalorder %s19, 1
    %p100 = scmp.ne.s32.totalorder %s95, %s97
    %p101 = scmp.eq.s32.totalorder %s19, 0
    %p102 = por %p100, %p101
    %p103 = scmp.ne.s32.totalorder %s95, %s97
    %p104 = scmp.eq.s32.totalorder %s24, 1
    %p105 = por %p103, %p104
    %p106 = scmp.ne.s32.totalorder %s97, %s98
    %p107 = scmp.eq.s32.totalorder %s24, 0
    %p108 = por %p106, %p107
    %p109 = scmp.ne.s32.totalorder %s97, %s98
    %p110 = scmp.eq.s32.totalorder %s25, 1
    %p111 = por %p109, %p110
    %p113 = scmp.ne.s32.totalorder %s98, %s112
    %p114 = scmp.eq.s32.totalorder %s25, 0
    %p115 = por %p113, %p114
    %s117 = sadd.s32 %s116, 1
    %p120 = scmp.eq.s32.totalorder %s19, 1
    %p121 = scmp.ne.s32.totalorder %s116, %s118
    %p122 = scmp.eq.s32.totalorder %s19, 0
    %p123 = por %p121, %p122
    %p124 = scmp.ne.s32.totalorder %s116, %s118
    %p125 = scmp.eq.s32.totalorder %s24, 1
    %p126 = por %p124, %p125
    %p127 = scmp.ne.s32.totalorder %s118, %s119
    %p128 = scmp.eq.s32.totalorder %s24, 0
    %p129 = por %p127, %p128
    %p130 = scmp.ne.s32.totalorder %s118, %s119
    %p131 = scmp.eq.s32.totalorder %s25, 1
    %p132 = por %p130, %p131
    %p134 = scmp.ne.s32.totalorder %s119, %s133
    %p135 = scmp.eq.s32.totalorder %s25, 0
    %p136 = por %p134, %p135
    %s138 = sadd.s32 %s137, 1
    %p141 = scmp.eq.s32.totalorder %s19, 1
    %p142 = scmp.ne.s32.totalorder %s137, %s139
    %p143 = scmp.eq.s32.totalorder %s19, 0
    %p144 = por %p142, %p143
    %p145 = scmp.ne.s32.totalorder %s137, %s139
    %p146 = scmp.eq.s32.totalorder %s24, 1
    %p147 = por %p145, %p146
    %p148 = scmp.ne.s32.totalorder %s139, %s140
    %p149 = scmp.eq.s32.totalorder %s24, 0
    %p150 = por %p148, %p149
    %p151 = scmp.ne.s32.totalorder %s139, %s140
    %p152 = scmp.eq.s32.totalorder %s25, 1
    %p153 = por %p151, %p152
    %p155 = scmp.ne.s32.totalorder %s140, %s154
    %p156 = scmp.eq.s32.totalorder %s25, 0
    %p157 = por %p155, %p156
    %s159 = sadd.s32 %s158, 1
    %p162 = scmp.eq.s32.totalorder %s19, 1
    %p163 = scmp.ne.s32.totalorder %s158, %s160
    %p164 = scmp.eq.s32.totalorder %s19, 0
    %p165 = por %p163, %p164
    %p166 = scmp.ne.s32.totalorder %s158, %s160
    %p167 = scmp.eq.s32.totalorder %s24, 1
    %p168 = por %p166, %p167
    %p169 = scmp.ne.s32.totalorder %s160, %s161
    %p170 = scmp.eq.s32.totalorder %s24, 0
    %p171 = por %p169, %p170
    %p172 = scmp.ne.s32.totalorder %s160, %s161
    %p173 = scmp.eq.s32.totalorder %s25, 1
    %p174 = por %p172, %p173
    %p176 = scmp.ne.s32.totalorder %s161, %s175
    %p177 = scmp.eq.s32.totalorder %s25, 0
    %p178 = por %p176, %p177
    %s180 = sadd.s32 %s179, 1
    %p183 = scmp.eq.s32.totalorder %s19, 1
    %p184 = scmp.ne.s32.totalorder %s179, %s181
    %p185 = scmp.eq.s32.totalorder %s19, 0
    %p186 = por %p184, %p185
    %p187 = scmp.ne.s32.totalorder %s179, %s181
    %p188 = scmp.eq.s32.totalorder %s24, 1
    %p189 = por %p187, %p188
    %p190 = scmp.ne.s32.totalorder %s181, %s182
    %p191 = scmp.eq.s32.totalorder %s24, 0
    %p192 = por %p190, %p191
    %p193 = scmp.ne.s32.totalorder %s181, %s182
    %p194 = scmp.eq.s32.totalorder %s25, 1
    %p195 = por %p193, %p194
    %p197 = scmp.ne.s32.totalorder %s182, %s196
    %p198 = scmp.eq.s32.totalorder %s25, 0
    %p199 = por %p197, %p198
    %s201 = sadd.s32 %s200, 1
    %p204 = scmp.eq.s32.totalorder %s19, 1
    %p205 = scmp.ne.s32.totalorder %s200, %s202
    %p206 = scmp.eq.s32.totalorder %s19, 0
    %p207 = por %p205, %p206
    %p208 = scmp.ne.s32.totalorder %s200, %s202
    %p209 = scmp.eq.s32.totalorder %s24, 1
    %p210 = por %p208, %p209
    %p211 = scmp.ne.s32.totalorder %s202, %s203
    %p212 = scmp.eq.s32.totalorder %s24, 0
    %p213 = por %p211, %p212
    %p214 = scmp.ne.s32.totalorder %s202, %s203
    %p215 = scmp.eq.s32.totalorder %s25, 1
    %p216 = por %p214, %p215
    %p218 = scmp.ne.s32.totalorder %s203, %s217
    %p219 = scmp.eq.s32.totalorder %s25, 0
    %p220 = por %p218, %p219
    %s222 = sadd.s32 %s221, 1
    %p225 = scmp.eq.s32.totalorder %s19, 1
    %p226 = scmp.ne.s32.totalorder %s221, %s223
    %p227 = scmp.eq.s32.totalorder %s19, 0
    %p228 = por %p226, %p227
    %p229 = scmp.ne.s32.totalorder %s221, %s223
    %p230 = scmp.eq.s32.totalorder %s24, 1
    %p231 = por %p229, %p230
    %p232 = scmp.ne.s32.totalorder %s223, %s224
    %p233 = scmp.eq.s32.totalorder %s24, 0
    %p234 = por %p232, %p233
    %p235 = scmp.ne.s32.totalorder %s223, %s224
    %p236 = scmp.eq.s32.totalorder %s25, 1
    %p237 = por %p235, %p236
    %p239 = scmp.ne.s32.totalorder %s224, %s238
    %p240 = scmp.eq.s32.totalorder %s25, 0
    %p241 = por %p239, %p240
    %s243 = sadd.s32 %s242, 1
    %p246 = scmp.eq.s32.totalorder %s19, 1
    %p247 = scmp.ne.s32.totalorder %s242, %s244
    %p248 = scmp.eq.s32.totalorder %s19, 0
    %p249 = por %p247, %p248
    %p250 = scmp.ne.s32.totalorder %s242, %s244
    %p251 = scmp.eq.s32.totalorder %s24, 1
    %p252 = por %p250, %p251
    %p253 = scmp.ne.s32.totalorder %s244, %s245
    %p254 = scmp.eq.s32.totalorder %s24, 0
    %p255 = por %p253, %p254
    %p256 = scmp.ne.s32.totalorder %s244, %s245
    %p257 = scmp.eq.s32.totalorder %s25, 1
    %p258 = por %p256, %p257
    %p260 = scmp.ne.s32.totalorder %s245, %s259
    %p261 = scmp.eq.s32.totalorder %s25, 0
    %p262 = por %p260, %p261
    %s264 = sadd.s32 %s263, 1
    %p267 = scmp.eq.s32.totalorder %s19, 1
    %p268 = scmp.ne.s32.totalorder %s263, %s265
    %p269 = scmp.eq.s32.totalorder %s19, 0
    %p270 = por %p268, %p269
    %p271 = scmp.ne.s32.totalorder %s263, %s265
    %p272 = scmp.eq.s32.totalorder %s24, 1
    %p273 = por %p271, %p272
    %p274 = scmp.ne.s32.totalorder %s265, %s266
    %p275 = scmp.eq.s32.totalorder %s24, 0
    %p276 = por %p274, %p275
    %p277 = scmp.ne.s32.totalorder %s265, %s266
    %p278 = scmp.eq.s32.totalorder %s25, 1
    %p279 = por %p277, %p278
    %p281 = scmp.ne.s32.totalorder %s266, %s280
    %p282 = scmp.eq.s32.totalorder %s25, 0
    %p283 = por %p281, %p282
    %s284 = ssub.s32 %s26, %s38
    %s285 = ssub.s32 %s27, %s34
    %s286 = sor.u32 %s284, %s285
    %p287 = scmp.eq.s32.totalorder %s286, 0
    %s289 = sadd.s32 %s288, 1
    %s290 = scalar_select %p287, %s288, %s289
    %p293 = pneg %p287
    %p294 = scmp.eq.s32.totalorder %s19, 1
    %p295 = por %p293, %p294
    %p296 = scmp.ne.s32.totalorder %s288, %s291
    %p297 = scmp.eq.s32.totalorder %s19, 0
    %p298 = por %p296, %p297
    %p299 = scmp.ne.s32.totalorder %s288, %s291
    %p300 = scmp.eq.s32.totalorder %s24, 1
    %p301 = por %p299, %p300
    %p302 = scmp.ne.s32.totalorder %s291, %s292
    %p303 = scmp.eq.s32.totalorder %s24, 0
    %p304 = por %p302, %p303
    %p305 = scmp.ne.s32.totalorder %s291, %s292
    %p306 = scmp.eq.s32.totalorder %s25, 1
    %p307 = por %p305, %p306
    %p309 = scmp.ne.s32.totalorder %s292, %s308
    %p310 = scmp.eq.s32.totalorder %s25, 0
    %p311 = por %p309, %p310
    %s312 = ssub.s32 %s26, %s38
    %s313 = ssub.s32 %s27, %s34
    %s314 = sor.u32 %s312, %s313
    %p315 = scmp.eq.s32.totalorder %s314, 0
    %s317 = sadd.s32 %s316, 1
    %s318 = scalar_select %p315, %s316, %s317
    %p321 = pneg %p315
    %p322 = scmp.eq.s32.totalorder %s19, 1
    %p323 = por %p321, %p322
    %p324 = scmp.ne.s32.totalorder %s316, %s319
    %p325 = scmp.eq.s32.totalorder %s19, 0
    %p326 = por %p324, %p325
    %p327 = scmp.ne.s32.totalorder %s316, %s319
    %p328 = scmp.eq.s32.totalorder %s24, 1
    %p329 = por %p327, %p328
    %p330 = scmp.ne.s32.totalorder %s319, %s320
    %p331 = scmp.eq.s32.totalorder %s24, 0
    %p332 = por %p330, %p331
    %p333 = scmp.ne.s32.totalorder %s319, %s320
    %p334 = scmp.eq.s32.totalorder %s25, 1
    %p335 = por %p333, %p334
    %p337 = scmp.ne.s32.totalorder %s320, %s336
    %p338 = scmp.eq.s32.totalorder %s25, 0
    %p339 = por %p337, %p338
    %p340 = scmp.le.s32.totalorder 1, %s19
    %p341 = scmp.lt.s32.totalorder %s19, 3
    %p342 = pnand %p340, %p341
    %p343 = pneg %p342
    // Predicated region
    $region9: #{dcu_down_forward.1} parent=5 // pred_check
      _
    $region10: #{dcu_down_forward.1} parent=5 // pred_check_branch
      %345 = sbr.rel (%p342) target = $region12
    $region11: #{dcu_down_forward.1} parent=5 // pred_region
      %s346 = ssub.s32 %s19, 1
      // Predicated region
      $region13: #{dcu_down_forward.1} parent=11 // pred_check
        %p347 = pneg %p108
      $region14: #{dcu_down_forward.1} parent=11 // pred_check_branch
        %349 = sbr.rel (%p347) target = $region16
      $region15: #{dcu_down_forward.1} parent=11 // pred_region
        _
      $region16: #{dcu_down_forward.1} parent=11 // pred_fallthru
        _
      // Predicated region
      $region17: #{dcu_down_forward.1} parent=11 // pred_check
        %p350 = pneg %p129
      $region18: #{dcu_down_forward.1} parent=11 // pred_check_branch
        %352 = sbr.rel (%p350) target = $region20
      $region19: #{dcu_down_forward.1} parent=11 // pred_region
        _
      $region20: #{dcu_down_forward.1} parent=11 // pred_fallthru
        _
      // Predicated region
      $region21: #{dcu_down_forward.1} parent=11 // pred_check
        %p353 = pneg %p150
      $region22: #{dcu_down_forward.1} parent=11 // pred_check_branch
        %355 = sbr.rel (%p353) target = $region24
      $region23: #{dcu_down_forward.1} parent=11 // pred_region
        _
      $region24: #{dcu_down_forward.1} parent=11 // pred_fallthru
        _
      // Predicated region
      $region25: #{dcu_down_forward.1} parent=11 // pred_check
        %p356 = pneg %p171
      $region26: #{dcu_down_forward.1} parent=11 // pred_check_branch
        %358 = sbr.rel (%p356) target = $region28
      $region27: #{dcu_down_forward.1} parent=11 // pred_region
        _
      $region28: #{dcu_down_forward.1} parent=11 // pred_fallthru
        _
      // Predicated region
      $region29: #{dcu_down_forward.1} parent=11 // pred_check
        %p359 = pneg %p192
      $region30: #{dcu_down_forward.1} parent=11 // pred_check_branch
        %361 = sbr.rel (%p359) target = $region32
      $region31: #{dcu_down_forward.1} parent=11 // pred_region
        _
      $region32: #{dcu_down_forward.1} parent=11 // pred_fallthru
        _
      // Predicated region
      $region33: #{dcu_down_forward.1} parent=11 // pred_check
        %p362 = pneg %p213
      $region34: #{dcu_down_forward.1} parent=11 // pred_check_branch
        %364 = sbr.rel (%p362) target = $region36
      $region35: #{dcu_down_forward.1} parent=11 // pred_region
        _
      $region36: #{dcu_down_forward.1} parent=11 // pred_fallthru
        _
      // Predicated region
      $region37: #{dcu_down_forward.1} parent=11 // pred_check
        %p365 = pneg %p234
      $region38: #{dcu_down_forward.1} parent=11 // pred_check_branch
        %367 = sbr.rel (%p365) target = $region40
      $region39: #{dcu_down_forward.1} parent=11 // pred_region
        _
      $region40: #{dcu_down_forward.1} parent=11 // pred_fallthru
        _
      // Predicated region
      $region41: #{dcu_down_forward.1} parent=11 // pred_check
        %p368 = pneg %p255
      $region42: #{dcu_down_forward.1} parent=11 // pred_check_branch
        %370 = sbr.rel (%p368) target = $region44
      $region43: #{dcu_down_forward.1} parent=11 // pred_region
        _
      $region44: #{dcu_down_forward.1} parent=11 // pred_fallthru
        _
      // Predicated region
      $region45: #{dcu_down_forward.1} parent=11 // pred_check
        %p371 = pneg %p276
      $region46: #{dcu_down_forward.1} parent=11 // pred_check_branch
        %373 = sbr.rel (%p371) target = $region48
      $region47: #{dcu_down_forward.1} parent=11 // pred_region
        _
      $region48: #{dcu_down_forward.1} parent=11 // pred_fallthru
        _
    $region12: #{dcu_down_forward.1} parent=5 // pred_fallthru
      _
    %p374 = scmp.lt.s32.totalorder %s19, 2
    // Predicated region
    $region49: #{dcu_down_forward.1} parent=5 // pred_check
      %p375 = pneg %p374
    $region50: #{dcu_down_forward.1} parent=5 // pred_check_branch
      %377 = sbr.rel (%p375) target = $region52
    $region51: #{dcu_down_forward.1} parent=5 // pred_region
      // Predicated region
      $region53: #{dcu_down_forward.1} parent=51 // pred_check
        %p378 = pneg %p53
      $region54: #{dcu_down_forward.1} parent=51 // pred_check_branch
        %380 = sbr.rel (%p378) target = $region56
      $region55: #{dcu_down_forward.1} parent=51 // pred_region
        %p381 = scmp.lt.s32.totalorder %s26, 1
        %s382 = scalar_select %p381, %s26, 1
        %p383 = scmp.lt.s32.totalorder %s27, 0
        %s384 = scalar_select %p383, %s27, 0
        %s385 = smul.addr %s382, 2
        %s386 = sadd.s32 %s384, %s385
        %s387 = smul.addr %s386, 8
        %s388 = scalar_lea.vmem %s0, %s387
      $region56: #{dcu_down_forward.1} parent=51 // pred_fallthru
        _
      // Predicated region
      $region57: #{dcu_down_forward.1} parent=51 // pred_check
        %p389 = pneg %p81
      $region58: #{dcu_down_forward.1} parent=51 // pred_check_branch
        %391 = sbr.rel (%p389) target = $region60
      $region59: #{dcu_down_forward.1} parent=51 // pred_region
        %p392 = scmp.lt.s32.totalorder %s26, 1
        %s393 = scalar_select %p392, %s26, 1
        %p394 = scmp.lt.s32.totalorder %s27, 0
        %s395 = scalar_select %p394, %s27, 0
        %s396 = smul.addr %s393, 8
        %s397 = sadd.s32 %s395, %s396
        %s398 = smul.addr %s397, 8
        %s399 = scalar_lea.vmem %s1, %s398
      $region60: #{dcu_down_forward.1} parent=51 // pred_fallthru
        _
    $region52: #{dcu_down_forward.1} parent=5 // pred_fallthru
      _
    %p400 = scmp.le.s32.totalorder 1, %s19
    %p401 = scmp.lt.s32.totalorder %s19, 3
    %p402 = pnand %p400, %p401
    %p403 = pneg %p402
    // Predicated region
    $region61: #{dcu_down_forward.1} parent=5 // pred_check
      _
    $region62: #{dcu_down_forward.1} parent=5 // pred_check_branch
      %405 = sbr.rel (%p402) target = $region64
    $region63: #{dcu_down_forward.1} parent=5 // pred_region
      %s406 = ssub.s32 %s19, 1
      %p407 = scmp.lt.s32.totalorder %s28, 1
      %s408 = scalar_select %p407, %s28, 1
      %p409 = scmp.lt.s32.totalorder %s29, 0
      %s410 = scalar_select %p409, %s29, 0
      %s411 = smul.addr %s408, 2
      %s412 = sadd.s32 %s410, %s411
      %s413 = smul.addr %s412, 8
      %s414 = scalar_lea.vmem %s0, %s413
      %p415 = pneg %p59
      %p416 = pneg %p56
      %p417 = scmp.lt.s32.totalorder %s28, 1
      %s418 = scalar_select %p417, %s28, 1
      %p419 = scmp.lt.s32.totalorder %s29, 0
      %s420 = scalar_select %p419, %s29, 0
      %s421 = smul.addr %s418, 8
      %s422 = sadd.s32 %s420, %s421
      %s423 = smul.addr %s422, 8
      %s424 = scalar_lea.vmem %s1, %s423
      %p425 = pneg %p87
      %p426 = pneg %p84
      %p427 = pneg %p108
      %p428 = pneg %p105
      %p429 = pneg %p129
      %p430 = pneg %p126
      %p431 = pneg %p150
      %p432 = pneg %p147
      %p433 = pneg %p171
      %p434 = pneg %p168
      %p435 = pneg %p192
      %p436 = pneg %p189
      %p437 = pneg %p213
      %p438 = pneg %p210
      %p439 = pneg %p234
      %p440 = pneg %p231
      %p441 = pneg %p255
      %p442 = pneg %p252
      %p443 = pneg %p276
      %p444 = pneg %p273
      %p445 = pneg %p304
      %p446 = pneg %p301
      %p447 = scmp.lt.s32.totalorder %s28, 1
      %s448 = scalar_select %p447, %s28, 1
      %p449 = scmp.lt.s32.totalorder %s29, 0
      %s450 = scalar_select %p449, %s29, 0
      %s451 = smul.addr %s448, 16
      %s452 = sadd.s32 %s450, %s451
      %s453 = smul.addr %s452, 8
      %s454 = scalar_lea.vmem %s11, %s453
      %p455 = pneg %p332
      %p456 = pneg %p329
      %p457 = scmp.lt.s32.totalorder %s28, 1
      %s458 = scalar_select %p457, %s28, 1
      %p459 = scmp.lt.s32.totalorder %s29, 0
      %s460 = scalar_select %p459, %s29, 0
      %s461 = smul.addr %s458, 16
      %s462 = sadd.s32 %s460, %s461
      %s463 = smul.addr %s462, 8
      %s464 = scalar_lea.vmem %s12, %s463
      %p465 = scmp.lt.s32.totalorder %s28, 1
      %s466 = scalar_select %p465, %s28, 1
      %p467 = scmp.lt.s32.totalorder %s29, 0
      %s468 = scalar_select %p467, %s29, 0
      %s469 = smul.addr %s466, 2
      %s470 = sadd.s32 %s468, %s469
      %s471 = smul.addr %s470, 8
      %s472 = scalar_lea.vmem %s0, %s471
      %p473 = scmp.lt.s32.totalorder %s28, 1
      %s474 = scalar_select %p473, %s28, 1
      %p475 = scmp.lt.s32.totalorder %s29, 0
      %s476 = scalar_select %p475, %s29, 0
      %s477 = smul.addr %s474, 8
      %s478 = sadd.s32 %s476, %s477
      %s479 = smul.addr %s478, 8
      %s480 = scalar_lea.vmem %s1, %s479
      %p481 = scmp.lt.s32.totalorder %s28, 1
      %s482 = scalar_select %p481, %s28, 1
      %p483 = scmp.lt.s32.totalorder %s29, 0
      %s484 = scalar_select %p483, %s29, 0
      %s485 = smul.addr %s482, 16
      %s486 = sadd.s32 %s484, %s485
      %s487 = smul.addr %s486, 8
      %s488 = scalar_lea.vmem %s11, %s487
      %p489 = scmp.lt.s32.totalorder %s28, 1
      %s490 = scalar_select %p489, %s28, 1
      %p491 = scmp.lt.s32.totalorder %s29, 0
      %s492 = scalar_select %p491, %s29, 0
      %s493 = smul.addr %s490, 16
      %s494 = sadd.s32 %s492, %s493
      %s495 = smul.addr %s494, 8
      %s496 = scalar_lea.vmem %s12, %s495
      %v497 = vld [vmem:[%s2] sm:$0xff]
      %v498 = vld [vmem:[%s2 + $0x8] sm:$0xff]
      %v499 = vld [vmem:[%s2 + $0x10] sm:$0xff]
      %v500 = vld [vmem:[%s2 + $0x18] sm:$0xff]
      %v501 = vld [vmem:[%s2 + $0x20] sm:$0xff]
      %v502 = vld [vmem:[%s2 + $0x28] sm:$0xff]
      %v503 = vld [vmem:[%s2 + $0x30] sm:$0xff]
      %v504 = vld [vmem:[%s2 + $0x38] sm:$0xff]
      %v505 = vld [vmem:[%s2 + $0x40] sm:$0xff]
      %v506 = vld [vmem:[%s2 + $0x48] sm:$0xff]
      %v507 = vld [vmem:[%s2 + $0x50] sm:$0xff]
      %v508 = vld [vmem:[%s2 + $0x58] sm:$0xff]
      %v509 = vld [vmem:[%s2 + $0x60] sm:$0xff]
      %v510 = vld [vmem:[%s2 + $0x68] sm:$0xff]
      %v511 = vld [vmem:[%s2 + $0x70] sm:$0xff]
      %v512 = vld [vmem:[%s2 + $0x78] sm:$0xff]
      %v513 = vld [vmem:[%s472] sm:$0xff]
      %v514 = vld [vmem:[%s472 + $0x8] sm:$0xff]
      %v515 = vld [vmem:[%s3] sm:$0xff]
      %v516 = vld [vmem:[%s3 + $0x8] sm:$0xff]
      %v517 = vld [vmem:[%s3 + $0x10] sm:$0xff]
      %v518 = vld [vmem:[%s3 + $0x18] sm:$0xff]
      %v519 = vld [vmem:[%s3 + $0x20] sm:$0xff]
      %v520 = vld [vmem:[%s3 + $0x28] sm:$0xff]
      %v521 = vld [vmem:[%s3 + $0x30] sm:$0xff]
      %v522 = vld [vmem:[%s3 + $0x38] sm:$0xff]
      %v523 = vld [vmem:[%s3 + $0x40] sm:$0xff]
      %v524 = vld [vmem:[%s3 + $0x48] sm:$0xff]
      %v525 = vld [vmem:[%s3 + $0x50] sm:$0xff]
      %v526 = vld [vmem:[%s3 + $0x58] sm:$0xff]
      %v527 = vld [vmem:[%s3 + $0x60] sm:$0xff]
      %v528 = vld [vmem:[%s3 + $0x68] sm:$0xff]
      %v529 = vld [vmem:[%s3 + $0x70] sm:$0xff]
      %v530 = vld [vmem:[%s3 + $0x78] sm:$0xff]
      %532 = vset.pattern.permute.xlu0 0
      %533 = vperm.xlu0 %532, %v515
      %v534 = vpop.permute.xlu0 %533
      %537 = vset.pattern.permute.xlu0 0
      %538 = vperm.xlu0 %537, %v516
      %v539 = vpop.permute.xlu0 %538
      %542 = vset.pattern.permute.xlu0 0
      %543 = vperm.xlu0 %542, %v517
      %v544 = vpop.permute.xlu0 %543
      %547 = vset.pattern.permute.xlu0 0
      %548 = vperm.xlu0 %547, %v518
      %v549 = vpop.permute.xlu0 %548
      %552 = vset.pattern.permute.xlu0 0
      %553 = vperm.xlu0 %552, %v519
      %v554 = vpop.permute.xlu0 %553
      %557 = vset.pattern.permute.xlu0 0
      %558 = vperm.xlu0 %557, %v520
      %v559 = vpop.permute.xlu0 %558
      %562 = vset.pattern.permute.xlu0 0
      %563 = vperm.xlu0 %562, %v521
      %v564 = vpop.permute.xlu0 %563
      %567 = vset.pattern.permute.xlu0 0
      %568 = vperm.xlu0 %567, %v522
      %v569 = vpop.permute.xlu0 %568
      %572 = vset.pattern.permute.xlu0 0
      %573 = vperm.xlu0 %572, %v523
      %v574 = vpop.permute.xlu0 %573
      %577 = vset.pattern.permute.xlu0 0
      %578 = vperm.xlu0 %577, %v524
      %v579 = vpop.permute.xlu0 %578
      %582 = vset.pattern.permute.xlu0 0
      %583 = vperm.xlu0 %582, %v525
      %v584 = vpop.permute.xlu0 %583
      %587 = vset.pattern.permute.xlu0 0
      %588 = vperm.xlu0 %587, %v526
      %v589 = vpop.permute.xlu0 %588
      %592 = vset.pattern.permute.xlu0 0
      %593 = vperm.xlu0 %592, %v527
      %v594 = vpop.permute.xlu0 %593
      %597 = vset.pattern.permute.xlu0 0
      %598 = vperm.xlu0 %597, %v528
      %v599 = vpop.permute.xlu0 %598
      %602 = vset.pattern.permute.xlu0 0
      %603 = vperm.xlu0 %602, %v529
      %v604 = vpop.permute.xlu0 %603
      %607 = vset.pattern.permute.xlu0 0
      %608 = vperm.xlu0 %607, %v530
      %v609 = vpop.permute.xlu0 %608
      %vm611 = vcmask 130048
      %v613 = vsel %vm611, %v497, 0
      %v616 = vsel %vm611, %v498, 0
      %v619 = vsel %vm611, %v499, 0
      %v622 = vsel %vm611, %v500, 0
      %v625 = vsel %vm611, %v501, 0
      %v628 = vsel %vm611, %v502, 0
      %v631 = vsel %vm611, %v503, 0
      %v634 = vsel %vm611, %v504, 0
      %v637 = vsel %vm611, %v505, 0
      %v640 = vsel %vm611, %v506, 0
      %v643 = vsel %vm611, %v507, 0
      %v646 = vsel %vm611, %v508, 0
      %v649 = vsel %vm611, %v509, 0
      %v652 = vsel %vm611, %v510, 0
      %v655 = vsel %vm611, %v511, 0
      %v658 = vsel %vm611, %v512, 0
      %660 = vmatpush.msra.mxu0 0.0
      %661 = vmatpush.msra.mxu0 0.0
      %662 = vmatpush.msra.mxu0 0.0
      %663 = vmatpush.msra.mxu0 0.0
      %664 = vmatpush.msra.mxu0 0.0
      %665 = vmatpush.msra.mxu0 0.0
      %666 = vmatpush.msra.mxu0 0.0
      %667 = vmatpush.msra.mxu0 0.0
      %668 = vmatpush.msra.mxu0 0.0
      %669 = vmatpush.msra.mxu0 0.0
      %670 = vmatpush.msra.mxu0 0.0
      %671 = vmatpush.msra.mxu0 0.0
      %672 = vmatpush.msra.mxu0 0.0
      %673 = vmatpush.msra.mxu0 0.0
      %674 = vmatpush.msra.mxu0 %v514
      %675 = vmatpush.msra.mxu0 %v513
      %676 = vmatmul.f32.gmra.mxu0 %v613
      %v677 = vpop.f32.mrf.mxu0
      %v678 = vadd.f32 %v534, %v677
      %679 = vmatmul.f32.gmra.mxu0 %v616
      %v680 = vpop.f32.mrf.mxu0
      %v681 = vadd.f32 %v539, %v680
      %682 = vmatmul.f32.gmra.mxu0 %v619
      %v683 = vpop.f32.mrf.mxu0
      %v684 = vadd.f32 %v544, %v683
      %685 = vmatmul.f32.gmra.mxu0 %v622
      %v686 = vpop.f32.mrf.mxu0
      %v687 = vadd.f32 %v549, %v686
      %688 = vmatmul.f32.gmra.mxu0 %v625
      %v689 = vpop.f32.mrf.mxu0
      %v690 = vadd.f32 %v554, %v689
      %691 = vmatmul.f32.gmra.mxu0 %v628
      %v692 = vpop.f32.mrf.mxu0
      %v693 = vadd.f32 %v559, %v692
      %694 = vmatmul.f32.gmra.mxu0 %v631
      %v695 = vpop.f32.mrf.mxu0
      %v696 = vadd.f32 %v564, %v695
      %697 = vmatmul.f32.gmra.mxu0 %v634
      %v698 = vpop.f32.mrf.mxu0
      %v699 = vadd.f32 %v569, %v698
      %700 = vmatmul.f32.gmra.mxu0 %v637
      %v701 = vpop.f32.mrf.mxu0
      %v702 = vadd.f32 %v574, %v701
      %703 = vmatmul.f32.gmra.mxu0 %v640
      %v704 = vpop.f32.mrf.mxu0
      %v705 = vadd.f32 %v579, %v704
      %706 = vmatmul.f32.gmra.mxu0 %v643
      %v707 = vpop.f32.mrf.mxu0
      %v708 = vadd.f32 %v584, %v707
      %709 = vmatmul.f32.gmra.mxu0 %v646
      %v710 = vpop.f32.mrf.mxu0
      %v711 = vadd.f32 %v589, %v710
      %712 = vmatmul.f32.gmra.mxu0 %v649
      %v713 = vpop.f32.mrf.mxu0
      %v714 = vadd.f32 %v594, %v713
      %715 = vmatmul.f32.gmra.mxu0 %v652
      %v716 = vpop.f32.mrf.mxu0
      %v717 = vadd.f32 %v599, %v716
      %718 = vmatmul.f32.gmra.mxu0 %v655
      %v719 = vpop.f32.mrf.mxu0
      %v720 = vadd.f32 %v604, %v719
      %721 = vmatmul.f32.gmra.mxu0 %v658
      %v722 = vpop.f32.mrf.mxu0
      %v723 = vadd.f32 %v609, %v722
      %724 = vdwg.mxu0
      %v725 = vld [vmem:[%s4] sm:$0xff]
      %v726 = vld [vmem:[%s4 + $0x8] sm:$0xff]
      %v727 = vld [vmem:[%s4 + $0x10] sm:$0xff]
      %v728 = vld [vmem:[%s4 + $0x18] sm:$0xff]
      %v729 = vld [vmem:[%s4 + $0x20] sm:$0xff]
      %v730 = vld [vmem:[%s4 + $0x28] sm:$0xff]
      %v731 = vld [vmem:[%s4 + $0x30] sm:$0xff]
      %v732 = vld [vmem:[%s4 + $0x38] sm:$0xff]
      %v733 = vld [vmem:[%s4 + $0x40] sm:$0xff]
      %v734 = vld [vmem:[%s4 + $0x48] sm:$0xff]
      %v735 = vld [vmem:[%s4 + $0x50] sm:$0xff]
      %v736 = vld [vmem:[%s4 + $0x58] sm:$0xff]
      %v737 = vld [vmem:[%s4 + $0x60] sm:$0xff]
      %v738 = vld [vmem:[%s4 + $0x68] sm:$0xff]
      %v739 = vld [vmem:[%s4 + $0x70] sm:$0xff]
      %v740 = vld [vmem:[%s4 + $0x78] sm:$0xff]
      %v741 = vld [vmem:[%s5] sm:$0xff]
      %v742 = vld [vmem:[%s5 + $0x8] sm:$0xff]
      %v743 = vld [vmem:[%s5 + $0x10] sm:$0xff]
      %v744 = vld [vmem:[%s5 + $0x18] sm:$0xff]
      %v745 = vld [vmem:[%s5 + $0x20] sm:$0xff]
      %v746 = vld [vmem:[%s5 + $0x28] sm:$0xff]
      %v747 = vld [vmem:[%s5 + $0x30] sm:$0xff]
      %v748 = vld [vmem:[%s5 + $0x38] sm:$0xff]
      %v749 = vld [vmem:[%s5 + $0x40] sm:$0xff]
      %v750 = vld [vmem:[%s5 + $0x48] sm:$0xff]
      %v751 = vld [vmem:[%s5 + $0x50] sm:$0xff]
      %v752 = vld [vmem:[%s5 + $0x58] sm:$0xff]
      %v753 = vld [vmem:[%s5 + $0x60] sm:$0xff]
      %v754 = vld [vmem:[%s5 + $0x68] sm:$0xff]
      %v755 = vld [vmem:[%s5 + $0x70] sm:$0xff]
      %v756 = vld [vmem:[%s5 + $0x78] sm:$0xff]
      %757 = vmatpush.msra.mxu0 %v723
      %758 = vmatpush.msra.mxu0 %v720
      %759 = vmatpush.msra.mxu0 %v717
      %760 = vmatpush.msra.mxu0 %v714
      %761 = vmatpush.msra.mxu0 %v711
      %762 = vmatpush.msra.mxu0 %v708
      %763 = vmatpush.msra.mxu0 %v705
      %764 = vmatpush.msra.mxu0 %v702
      %765 = vmatpush.msra.mxu0 %v699
      %766 = vmatpush.msra.mxu0 %v696
      %767 = vmatpush.msra.mxu0 %v693
      %768 = vmatpush.msra.mxu0 %v690
      %769 = vmatpush.msra.mxu0 %v687
      %770 = vmatpush.msra.mxu0 %v684
      %771 = vmatpush.msra.mxu0 %v681
      %772 = vmatpush.msra.mxu0 %v678
      %773 = vmatmul.f32.gmra.mxu0 1.0
      %v774 = vpop.f32.mrf.mxu0
      %v775 = vadd.f32 0.0, %v774
      %776 = vdwg.mxu0
      %v777 = vmul.f32 %v775, 0.0078125
      %v778 = vperm.slane %v777, 0
      %v779 = vsub.f32 %v678, %v778
      %v780 = vsub.f32 %v681, %v778
      %v781 = vsub.f32 %v684, %v778
      %v782 = vsub.f32 %v687, %v778
      %v783 = vsub.f32 %v690, %v778
      %v784 = vsub.f32 %v693, %v778
      %v785 = vsub.f32 %v696, %v778
      %v786 = vsub.f32 %v699, %v778
      %v787 = vsub.f32 %v702, %v778
      %v788 = vsub.f32 %v705, %v778
      %v789 = vsub.f32 %v708, %v778
      %v790 = vsub.f32 %v711, %v778
      %v791 = vsub.f32 %v714, %v778
      %v792 = vsub.f32 %v717, %v778
      %v793 = vsub.f32 %v720, %v778
      %v794 = vsub.f32 %v723, %v778
      %v795 = vmul.f32 %v779, %v779
      %v796 = vmul.f32 %v780, %v780
      %v797 = vmul.f32 %v781, %v781
      %v798 = vmul.f32 %v782, %v782
      %v799 = vmul.f32 %v783, %v783
      %v800 = vmul.f32 %v784, %v784
      %v801 = vmul.f32 %v785, %v785
      %v802 = vmul.f32 %v786, %v786
      %v803 = vmul.f32 %v787, %v787
      %v804 = vmul.f32 %v788, %v788
      %v805 = vmul.f32 %v789, %v789
      %v806 = vmul.f32 %v790, %v790
      %v807 = vmul.f32 %v791, %v791
      %v808 = vmul.f32 %v792, %v792
      %v809 = vmul.f32 %v793, %v793
      %v810 = vmul.f32 %v794, %v794
      %811 = vmatpush.msra.mxu0 %v810
      %812 = vmatpush.msra.mxu0 %v809
      %813 = vmatpush.msra.mxu0 %v808
      %814 = vmatpush.msra.mxu0 %v807
      %815 = vmatpush.msra.mxu0 %v806
      %816 = vmatpush.msra.mxu0 %v805
      %817 = vmatpush.msra.mxu0 %v804
      %818 = vmatpush.msra.mxu0 %v803
      %819 = vmatpush.msra.mxu0 %v802
      %820 = vmatpush.msra.mxu0 %v801
      %821 = vmatpush.msra.mxu0 %v800
      %822 = vmatpush.msra.mxu0 %v799
      %823 = vmatpush.msra.mxu0 %v798
      %824 = vmatpush.msra.mxu0 %v797
      %825 = vmatpush.msra.mxu0 %v796
      %826 = vmatpush.msra.mxu0 %v795
      %827 = vmatmul.f32.gmra.mxu0 1.0
      %v828 = vpop.f32.mrf.mxu0
      %v829 = vadd.f32 0.0, %v828
      %830 = vdwg.mxu0
      %v831 = vmul.f32 %v829, 0.0078125
      %v832 = vadd.f32 %v831, 1e-06
      %v833 = vrsqrt.pop %v832
      %v834 = vmul.f32 %v833, %v832
      %v835 = vmul.f32 %v834, %v833
      %v836 = vmul.f32 0.5, %v835
      %v837 = vsub.f32 1.5, %v836
      %v838 = vmul.f32 %v833, %v837
      %vm839 = vweird.f32 %v832
      %vm840 = vweird.f32 %v833
      %vm841 = vmor %vm839, %vm840
      %v842 = vsel %vm841, %v833, %v838
      %v843 = vperm.slane %v842, 0
      %v844 = vmul.f32 %v779, %v843
      %v845 = vmul.f32 %v780, %v843
      %v846 = vmul.f32 %v781, %v843
      %v847 = vmul.f32 %v782, %v843
      %v848 = vmul.f32 %v783, %v843
      %v849 = vmul.f32 %v784, %v843
      %v850 = vmul.f32 %v785, %v843
      %v851 = vmul.f32 %v786, %v843
      %v852 = vmul.f32 %v787, %v843
      %v853 = vmul.f32 %v788, %v843
      %v854 = vmul.f32 %v789, %v843
      %v855 = vmul.f32 %v790, %v843
      %v856 = vmul.f32 %v791, %v843
      %v857 = vmul.f32 %v792, %v843
      %v858 = vmul.f32 %v793, %v843
      %v859 = vmul.f32 %v794, %v843
      %861 = vset.pattern.permute.xlu0 0
      %862 = vperm.xlu0 %861, %v725
      %v863 = vpop.permute.xlu0 %862
      %866 = vset.pattern.permute.xlu0 0
      %867 = vperm.xlu0 %866, %v726
      %v868 = vpop.permute.xlu0 %867
      %871 = vset.pattern.permute.xlu0 0
      %872 = vperm.xlu0 %871, %v727
      %v873 = vpop.permute.xlu0 %872
      %876 = vset.pattern.permute.xlu0 0
      %877 = vperm.xlu0 %876, %v728
      %v878 = vpop.permute.xlu0 %877
      %881 = vset.pattern.permute.xlu0 0
      %882 = vperm.xlu0 %881, %v729
      %v883 = vpop.permute.xlu0 %882
      %886 = vset.pattern.permute.xlu0 0
      %887 = vperm.xlu0 %886, %v730
      %v888 = vpop.permute.xlu0 %887
      %891 = vset.pattern.permute.xlu0 0
      %892 = vperm.xlu0 %891, %v731
      %v893 = vpop.permute.xlu0 %892
      %896 = vset.pattern.permute.xlu0 0
      %897 = vperm.xlu0 %896, %v732
      %v898 = vpop.permute.xlu0 %897
      %901 = vset.pattern.permute.xlu0 0
      %902 = vperm.xlu0 %901, %v733
      %v903 = vpop.permute.xlu0 %902
      %906 = vset.pattern.permute.xlu0 0
      %907 = vperm.xlu0 %906, %v734
      %v908 = vpop.permute.xlu0 %907
      %911 = vset.pattern.permute.xlu0 0
      %912 = vperm.xlu0 %911, %v735
      %v913 = vpop.permute.xlu0 %912
      %916 = vset.pattern.permute.xlu0 0
      %917 = vperm.xlu0 %916, %v736
      %v918 = vpop.permute.xlu0 %917
      %921 = vset.pattern.permute.xlu0 0
      %922 = vperm.xlu0 %921, %v737
      %v923 = vpop.permute.xlu0 %922
      %926 = vset.pattern.permute.xlu0 0
      %927 = vperm.xlu0 %926, %v738
      %v928 = vpop.permute.xlu0 %927
      %931 = vset.pattern.permute.xlu0 0
      %932 = vperm.xlu0 %931, %v739
      %v933 = vpop.permute.xlu0 %932
      %936 = vset.pattern.permute.xlu0 0
      %937 = vperm.xlu0 %936, %v740
      %v938 = vpop.permute.xlu0 %937
      %v940 = vmul.f32 %v844, %v863
      %v941 = vmul.f32 %v845, %v868
      %v942 = vmul.f32 %v846, %v873
      %v943 = vmul.f32 %v847, %v878
      %v944 = vmul.f32 %v848, %v883
      %v945 = vmul.f32 %v849, %v888
      %v946 = vmul.f32 %v850, %v893
      %v947 = vmul.f32 %v851, %v898
      %v948 = vmul.f32 %v852, %v903
      %v949 = vmul.f32 %v853, %v908
      %v950 = vmul.f32 %v854, %v913
      %v951 = vmul.f32 %v855, %v918
      %v952 = vmul.f32 %v856, %v923
      %v953 = vmul.f32 %v857, %v928
      %v954 = vmul.f32 %v858, %v933
      %v955 = vmul.f32 %v859, %v938
      %957 = vset.pattern.permute.xlu0 0
      %958 = vperm.xlu0 %957, %v741
      %v959 = vpop.permute.xlu0 %958
      %962 = vset.pattern.permute.xlu0 0
      %963 = vperm.xlu0 %962, %v742
      %v964 = vpop.permute.xlu0 %963
      %967 = vset.pattern.permute.xlu0 0
      %968 = vperm.xlu0 %967, %v743
      %v969 = vpop.permute.xlu0 %968
      %972 = vset.pattern.permute.xlu0 0
      %973 = vperm.xlu0 %972, %v744
      %v974 = vpop.permute.xlu0 %973
      %977 = vset.pattern.permute.xlu0 0
      %978 = vperm.xlu0 %977, %v745
      %v979 = vpop.permute.xlu0 %978
      %982 = vset.pattern.permute.xlu0 0
      %983 = vperm.xlu0 %982, %v746
      %v984 = vpop.permute.xlu0 %983
      %987 = vset.pattern.permute.xlu0 0
      %988 = vperm.xlu0 %987, %v747
      %v989 = vpop.permute.xlu0 %988
      %992 = vset.pattern.permute.xlu0 0
      %993 = vperm.xlu0 %992, %v748
      %v994 = vpop.permute.xlu0 %993
      %997 = vset.pattern.permute.xlu0 0
      %998 = vperm.xlu0 %997, %v749
      %v999 = vpop.permute.xlu0 %998
      %1002 = vset.pattern.permute.xlu0 0
      %1003 = vperm.xlu0 %1002, %v750
      %v1004 = vpop.permute.xlu0 %1003
      %1007 = vset.pattern.permute.xlu0 0
      %1008 = vperm.xlu0 %1007, %v751
      %v1009 = vpop.permute.xlu0 %1008
      %1012 = vset.pattern.permute.xlu0 0
      %1013 = vperm.xlu0 %1012, %v752
      %v1014 = vpop.permute.xlu0 %1013
      %1017 = vset.pattern.permute.xlu0 0
      %1018 = vperm.xlu0 %1017, %v753
      %v1019 = vpop.permute.xlu0 %1018
      %1022 = vset.pattern.permute.xlu0 0
      %1023 = vperm.xlu0 %1022, %v754
      %v1024 = vpop.permute.xlu0 %1023
      %1027 = vset.pattern.permute.xlu0 0
      %1028 = vperm.xlu0 %1027, %v755
      %v1029 = vpop.permute.xlu0 %1028
      %1032 = vset.pattern.permute.xlu0 0
      %1033 = vperm.xlu0 %1032, %v756
      %v1034 = vpop.permute.xlu0 %1033
      %v1036 = vadd.f32 %v940, %v959
      %v1037 = vadd.f32 %v941, %v964
      %v1038 = vadd.f32 %v942, %v969
      %v1039 = vadd.f32 %v943, %v974
      %v1040 = vadd.f32 %v944, %v979
      %v1041 = vadd.f32 %v945, %v984
      %v1042 = vadd.f32 %v946, %v989
      %v1043 = vadd.f32 %v947, %v994
      %v1044 = vadd.f32 %v948, %v999
      %v1045 = vadd.f32 %v949, %v1004
      %v1046 = vadd.f32 %v950, %v1009
      %v1047 = vadd.f32 %v951, %v1014
      %v1048 = vadd.f32 %v952, %v1019
      %v1049 = vadd.f32 %v953, %v1024
      %v1050 = vadd.f32 %v954, %v1029
      %v1051 = vadd.f32 %v955, %v1034
      %v1052 = vmul.f32 %v1036, 0.5
      %v1053 = vmul.f32 %v1037, 0.5
      %v1054 = vmul.f32 %v1038, 0.5
      %v1055 = vmul.f32 %v1039, 0.5
      %v1056 = vmul.f32 %v1040, 0.5
      %v1057 = vmul.f32 %v1041, 0.5
      %v1058 = vmul.f32 %v1042, 0.5
      %v1059 = vmul.f32 %v1043, 0.5
      %v1060 = vmul.f32 %v1044, 0.5
      %v1061 = vmul.f32 %v1045, 0.5
      %v1062 = vmul.f32 %v1046, 0.5
      %v1063 = vmul.f32 %v1047, 0.5
      %v1064 = vmul.f32 %v1048, 0.5
      %v1065 = vmul.f32 %v1049, 0.5
      %v1066 = vmul.f32 %v1050, 0.5
      %v1067 = vmul.f32 %v1051, 0.5
      %v1068 = vmul.f32 %v1036, 0.044715
      %v1069 = vmul.f32 %v1037, 0.044715
      %v1070 = vmul.f32 %v1038, 0.044715
      %v1071 = vmul.f32 %v1039, 0.044715
      %v1072 = vmul.f32 %v1040, 0.044715
      %v1073 = vmul.f32 %v1041, 0.044715
      %v1074 = vmul.f32 %v1042, 0.044715
      %v1075 = vmul.f32 %v1043, 0.044715
      %v1076 = vmul.f32 %v1044, 0.044715
      %v1077 = vmul.f32 %v1045, 0.044715
      %v1078 = vmul.f32 %v1046, 0.044715
      %v1079 = vmul.f32 %v1047, 0.044715
      %v1080 = vmul.f32 %v1048, 0.044715
      %v1081 = vmul.f32 %v1049, 0.044715
      %v1082 = vmul.f32 %v1050, 0.044715
      %v1083 = vmul.f32 %v1051, 0.044715
      %v1084 = vmul.f32 %v1068, %v1036
      %v1085 = vmul.f32 %v1069, %v1037
      %v1086 = vmul.f32 %v1070, %v1038
      %v1087 = vmul.f32 %v1071, %v1039
      %v1088 = vmul.f32 %v1072, %v1040
      %v1089 = vmul.f32 %v1073, %v1041
      %v1090 = vmul.f32 %v1074, %v1042
      %v1091 = vmul.f32 %v1075, %v1043
      %v1092 = vmul.f32 %v1076, %v1044
      %v1093 = vmul.f32 %v1077, %v1045
      %v1094 = vmul.f32 %v1078, %v1046
      %v1095 = vmul.f32 %v1079, %v1047
      %v1096 = vmul.f32 %v1080, %v1048
      %v1097 = vmul.f32 %v1081, %v1049
      %v1098 = vmul.f32 %v1082, %v1050
      %v1099 = vmul.f32 %v1083, %v1051
      %v1100 = vmul.f32 %v1084, %v1036
      %v1101 = vmul.f32 %v1085, %v1037
      %v1102 = vmul.f32 %v1086, %v1038
      %v1103 = vmul.f32 %v1087, %v1039
      %v1104 = vmul.f32 %v1088, %v1040
      %v1105 = vmul.f32 %v1089, %v1041
      %v1106 = vmul.f32 %v1090, %v1042
      %v1107 = vmul.f32 %v1091, %v1043
      %v1108 = vmul.f32 %v1092, %v1044
      %v1109 = vmul.f32 %v1093, %v1045
      %v1110 = vmul.f32 %v1094, %v1046
      %v1111 = vmul.f32 %v1095, %v1047
      %v1112 = vmul.f32 %v1096, %v1048
      %v1113 = vmul.f32 %v1097, %v1049
      %v1114 = vmul.f32 %v1098, %v1050
      %v1115 = vmul.f32 %v1099, %v1051
      %v1116 = vadd.f32 %v1036, %v1100
      %v1117 = vadd.f32 %v1037, %v1101
      %v1118 = vadd.f32 %v1038, %v1102
      %v1119 = vadd.f32 %v1039, %v1103
      %v1120 = vadd.f32 %v1040, %v1104
      %v1121 = vadd.f32 %v1041, %v1105
      %v1122 = vadd.f32 %v1042, %v1106
      %v1123 = vadd.f32 %v1043, %v1107
      %v1124 = vadd.f32 %v1044, %v1108
      %v1125 = vadd.f32 %v1045, %v1109
      %v1126 = vadd.f32 %v1046, %v1110
      %v1127 = vadd.f32 %v1047, %v1111
      %v1128 = vadd.f32 %v1048, %v1112
      %v1129 = vadd.f32 %v1049, %v1113
      %v1130 = vadd.f32 %v1050, %v1114
      %v1131 = vadd.f32 %v1051, %v1115
      %v1132 = vmul.f32 %v1116, 0.7978846
      %v1133 = vmul.f32 %v1117, 0.7978846
      %v1134 = vmul.f32 %v1118, 0.7978846
      %v1135 = vmul.f32 %v1119, 0.7978846
      %v1136 = vmul.f32 %v1120, 0.7978846
      %v1137 = vmul.f32 %v1121, 0.7978846
      %v1138 = vmul.f32 %v1122, 0.7978846
      %v1139 = vmul.f32 %v1123, 0.7978846
      %v1140 = vmul.f32 %v1124, 0.7978846
      %v1141 = vmul.f32 %v1125, 0.7978846
      %v1142 = vmul.f32 %v1126, 0.7978846
      %v1143 = vmul.f32 %v1127, 0.7978846
      %v1144 = vmul.f32 %v1128, 0.7978846
      %v1145 = vmul.f32 %v1129, 0.7978846
      %v1146 = vmul.f32 %v1130, 0.7978846
      %v1147 = vmul.f32 %v1131, 0.7978846
      %v1148 = vtanh.pop %v1132
      %v1149 = vtanh.pop %v1133
      %v1150 = vtanh.pop %v1134
      %v1151 = vtanh.pop %v1135
      %v1152 = vtanh.pop %v1136
      %v1153 = vtanh.pop %v1137
      %v1154 = vtanh.pop %v1138
      %v1155 = vtanh.pop %v1139
      %v1156 = vtanh.pop %v1140
      %v1157 = vtanh.pop %v1141
      %v1158 = vtanh.pop %v1142
      %v1159 = vtanh.pop %v1143
      %v1160 = vtanh.pop %v1144
      %v1161 = vtanh.pop %v1145
      %v1162 = vtanh.pop %v1146
      %v1163 = vtanh.pop %v1147
      %v1164 = vadd.f32 %v1148, 1.0
      %v1165 = vadd.f32 %v1149, 1.0
      %v1166 = vadd.f32 %v1150, 1.0
      %v1167 = vadd.f32 %v1151, 1.0
      %v1168 = vadd.f32 %v1152, 1.0
      %v1169 = vadd.f32 %v1153, 1.0
      %v1170 = vadd.f32 %v1154, 1.0
      %v1171 = vadd.f32 %v1155, 1.0
      %v1172 = vadd.f32 %v1156, 1.0
      %v1173 = vadd.f32 %v1157, 1.0
      %v1174 = vadd.f32 %v1158, 1.0
      %v1175 = vadd.f32 %v1159, 1.0
      %v1176 = vadd.f32 %v1160, 1.0
      %v1177 = vadd.f32 %v1161, 1.0
      %v1178 = vadd.f32 %v1162, 1.0
      %v1179 = vadd.f32 %v1163, 1.0
      %v1180 = vmul.f32 %v1052, %v1164
      %v1181 = vmul.f32 %v1053, %v1165
      %v1182 = vmul.f32 %v1054, %v1166
      %v1183 = vmul.f32 %v1055, %v1167
      %v1184 = vmul.f32 %v1056, %v1168
      %v1185 = vmul.f32 %v1057, %v1169
      %v1186 = vmul.f32 %v1058, %v1170
      %v1187 = vmul.f32 %v1059, %v1171
      %v1188 = vmul.f32 %v1060, %v1172
      %v1189 = vmul.f32 %v1061, %v1173
      %v1190 = vmul.f32 %v1062, %v1174
      %v1191 = vmul.f32 %v1063, %v1175
      %v1192 = vmul.f32 %v1064, %v1176
      %v1193 = vmul.f32 %v1065, %v1177
      %v1194 = vmul.f32 %v1066, %v1178
      %v1195 = vmul.f32 %v1067, %v1179
      %vm1196 = vcmask 523264
      %1197 = vst.msk [vmem:[%s488] sm:$0xff] %vm1196, %v1180
      %1198 = vst.msk [vmem:[%s488 + $0x8] sm:$0xff] %vm1196, %v1181
      %1199 = vst.msk [vmem:[%s488 + $0x10] sm:$0xff] %vm1196, %v1182
      %1200 = vst.msk [vmem:[%s488 + $0x18] sm:$0xff] %vm1196, %v1183
      %1201 = vst.msk [vmem:[%s488 + $0x20] sm:$0xff] %vm1196, %v1184
      %1202 = vst.msk [vmem:[%s488 + $0x28] sm:$0xff] %vm1196, %v1185
      %1203 = vst.msk [vmem:[%s488 + $0x30] sm:$0xff] %vm1196, %v1186
      %1204 = vst.msk [vmem:[%s488 + $0x38] sm:$0xff] %vm1196, %v1187
      %1205 = vst.msk [vmem:[%s488 + $0x40] sm:$0xff] %vm1196, %v1188
      %1206 = vst.msk [vmem:[%s488 + $0x48] sm:$0xff] %vm1196, %v1189
      %1207 = vst.msk [vmem:[%s488 + $0x50] sm:$0xff] %vm1196, %v1190
      %1208 = vst.msk [vmem:[%s488 + $0x58] sm:$0xff] %vm1196, %v1191
      %1209 = vst.msk [vmem:[%s488 + $0x60] sm:$0xff] %vm1196, %v1192
      %1210 = vst.msk [vmem:[%s488 + $0x68] sm:$0xff] %vm1196, %v1193
      %1211 = vst.msk [vmem:[%s488 + $0x70] sm:$0xff] %vm1196, %v1194
      %1212 = vst.msk [vmem:[%s488 + $0x78] sm:$0xff] %vm1196, %v1195
      %v1213 = vld [vmem:[%s6] sm:$0xff]
      %v1214 = vld [vmem:[%s6 + $0x8] sm:$0xff]
      %v1215 = vld [vmem:[%s6 + $0x10] sm:$0xff]
      %v1216 = vld [vmem:[%s6 + $0x18] sm:$0xff]
      %v1217 = vld [vmem:[%s6 + $0x20] sm:$0xff]
      %v1218 = vld [vmem:[%s6 + $0x28] sm:$0xff]
      %v1219 = vld [vmem:[%s6 + $0x30] sm:$0xff]
      %v1220 = vld [vmem:[%s6 + $0x38] sm:$0xff]
      %v1221 = vld [vmem:[%s6 + $0x40] sm:$0xff]
      %v1222 = vld [vmem:[%s6 + $0x48] sm:$0xff]
      %v1223 = vld [vmem:[%s6 + $0x50] sm:$0xff]
      %v1224 = vld [vmem:[%s6 + $0x58] sm:$0xff]
      %v1225 = vld [vmem:[%s6 + $0x60] sm:$0xff]
      %v1226 = vld [vmem:[%s6 + $0x68] sm:$0xff]
      %v1227 = vld [vmem:[%s6 + $0x70] sm:$0xff]
      %v1228 = vld [vmem:[%s6 + $0x78] sm:$0xff]
      %v1229 = vld [vmem:[%s480] sm:$0xff]
      %v1230 = vld [vmem:[%s480 + $0x8] sm:$0xff]
      %v1231 = vld [vmem:[%s480 + $0x10] sm:$0xff]
      %v1232 = vld [vmem:[%s480 + $0x18] sm:$0xff]
      %v1233 = vld [vmem:[%s480 + $0x20] sm:$0xff]
      %v1234 = vld [vmem:[%s480 + $0x28] sm:$0xff]
      %v1235 = vld [vmem:[%s480 + $0x30] sm:$0xff]
      %v1236 = vld [vmem:[%s480 + $0x38] sm:$0xff]
      %v1237 = vld [vmem:[%s7] sm:$0xff]
      %v1238 = vld [vmem:[%s7 + $0x8] sm:$0xff]
      %v1239 = vld [vmem:[%s7 + $0x10] sm:$0xff]
      %v1240 = vld [vmem:[%s7 + $0x18] sm:$0xff]
      %v1241 = vld [vmem:[%s7 + $0x20] sm:$0xff]
      %v1242 = vld [vmem:[%s7 + $0x28] sm:$0xff]
      %v1243 = vld [vmem:[%s7 + $0x30] sm:$0xff]
      %v1244 = vld [vmem:[%s7 + $0x38] sm:$0xff]
      %v1245 = vld [vmem:[%s7 + $0x40] sm:$0xff]
      %v1246 = vld [vmem:[%s7 + $0x48] sm:$0xff]
      %v1247 = vld [vmem:[%s7 + $0x50] sm:$0xff]
      %v1248 = vld [vmem:[%s7 + $0x58] sm:$0xff]
      %v1249 = vld [vmem:[%s7 + $0x60] sm:$0xff]
      %v1250 = vld [vmem:[%s7 + $0x68] sm:$0xff]
      %v1251 = vld [vmem:[%s7 + $0x70] sm:$0xff]
      %v1252 = vld [vmem:[%s7 + $0x78] sm:$0xff]
      %1253 = vmatpush.msra.mxu0 %v1195
      %1254 = vmatpush.msra.mxu0 %v1194
      %1255 = vmatpush.msra.mxu0 %v1193
      %1256 = vmatpush.msra.mxu0 %v1192
      %1257 = vmatpush.msra.mxu0 %v1191
      %1258 = vmatpush.msra.mxu0 %v1190
      %1259 = vmatpush.msra.mxu0 %v1189
      %1260 = vmatpush.msra.mxu0 %v1188
      %1261 = vmatpush.msra.mxu0 %v1187
      %1262 = vmatpush.msra.mxu0 %v1186
      %1263 = vmatpush.msra.mxu0 %v1185
      %1264 = vmatpush.msra.mxu0 %v1184
      %1265 = vmatpush.msra.mxu0 %v1183
      %1266 = vmatpush.msra.mxu0 %v1182
      %1267 = vmatpush.msra.mxu0 %v1181
      %1268 = vmatpush.msra.mxu0 %v1180
      %1269 = vmatmul.f32.gmra.mxu0 %v1237
      %v1270 = vpop.f32.mrf.mxu0
      %v1271 = vadd.f32 0.0, %v1270
      %1272 = vmatmul.f32.gmra.mxu0 %v1238
      %v1273 = vpop.f32.mrf.mxu0
      %v1274 = vadd.f32 0.0, %v1273
      %1275 = vmatmul.f32.gmra.mxu0 %v1239
      %v1276 = vpop.f32.mrf.mxu0
      %v1277 = vadd.f32 0.0, %v1276
      %1278 = vmatmul.f32.gmra.mxu0 %v1240
      %v1279 = vpop.f32.mrf.mxu0
      %v1280 = vadd.f32 0.0, %v1279
      %1281 = vmatmul.f32.gmra.mxu0 %v1241
      %v1282 = vpop.f32.mrf.mxu0
      %v1283 = vadd.f32 0.0, %v1282
      %1284 = vmatmul.f32.gmra.mxu0 %v1242
      %v1285 = vpop.f32.mrf.mxu0
      %v1286 = vadd.f32 0.0, %v1285
      %1287 = vmatmul.f32.gmra.mxu0 %v1243
      %v1288 = vpop.f32.mrf.mxu0
      %v1289 = vadd.f32 0.0, %v1288
      %1290 = vmatmul.f32.gmra.mxu0 %v1244
      %v1291 = vpop.f32.mrf.mxu0
      %v1292 = vadd.f32 0.0, %v1291
      %1293 = vmatmul.f32.gmra.mxu0 %v1245
      %v1294 = vpop.f32.mrf.mxu0
      %v1295 = vadd.f32 0.0, %v1294
      %1296 = vmatmul.f32.gmra.mxu0 %v1246
      %v1297 = vpop.f32.mrf.mxu0
      %v1298 = vadd.f32 0.0, %v1297
      %1299 = vmatmul.f32.gmra.mxu0 %v1247
      %v1300 = vpop.f32.mrf.mxu0
      %v1301 = vadd.f32 0.0, %v1300
      %1302 = vmatmul.f32.gmra.mxu0 %v1248
      %v1303 = vpop.f32.mrf.mxu0
      %v1304 = vadd.f32 0.0, %v1303
      %1305 = vmatmul.f32.gmra.mxu0 %v1249
      %v1306 = vpop.f32.mrf.mxu0
      %v1307 = vadd.f32 0.0, %v1306
      %1308 = vmatmul.f32.gmra.mxu0 %v1250
      %v1309 = vpop.f32.mrf.mxu0
      %v1310 = vadd.f32 0.0, %v1309
      %1311 = vmatmul.f32.gmra.mxu0 %v1251
      %v1312 = vpop.f32.mrf.mxu0
      %v1313 = vadd.f32 0.0, %v1312
      %1314 = vmatmul.f32.gmra.mxu0 %v1252
      %v1315 = vpop.f32.mrf.mxu0
      %v1316 = vadd.f32 0.0, %v1315
      %1317 = vdwg.mxu0
      %v1319 = vsel %vm1196, %v1213, 0
      %v1322 = vsel %vm1196, %v1214, 0
      %v1325 = vsel %vm1196, %v1215, 0
      %v1328 = vsel %vm1196, %v1216, 0
      %v1331 = vsel %vm1196, %v1217, 0
      %v1334 = vsel %vm1196, %v1218, 0
      %v1337 = vsel %vm1196, %v1219, 0
      %v1340 = vsel %vm1196, %v1220, 0
      %v1343 = vsel %vm1196, %v1221, 0
      %v1346 = vsel %vm1196, %v1222, 0
      %v1349 = vsel %vm1196, %v1223, 0
      %v1352 = vsel %vm1196, %v1224, 0
      %v1355 = vsel %vm1196, %v1225, 0
      %v1358 = vsel %vm1196, %v1226, 0
      %v1361 = vsel %vm1196, %v1227, 0
      %v1364 = vsel %vm1196, %v1228, 0
      %1366 = vmatpush.msra.mxu0 0.0
      %1367 = vmatpush.msra.mxu0 0.0
      %1368 = vmatpush.msra.mxu0 0.0
      %1369 = vmatpush.msra.mxu0 0.0
      %1370 = vmatpush.msra.mxu0 0.0
      %1371 = vmatpush.msra.mxu0 0.0
      %1372 = vmatpush.msra.mxu0 0.0
      %1373 = vmatpush.msra.mxu0 0.0
      %1374 = vmatpush.msra.mxu0 %v1236
      %1375 = vmatpush.msra.mxu0 %v1235
      %1376 = vmatpush.msra.mxu0 %v1234
      %1377 = vmatpush.msra.mxu0 %v1233
      %1378 = vmatpush.msra.mxu0 %v1232
      %1379 = vmatpush.msra.mxu0 %v1231
      %1380 = vmatpush.msra.mxu0 %v1230
      %1381 = vmatpush.msra.mxu0 %v1229
      %1382 = vmatmul.f32.gmra.mxu0 %v1319
      %v1383 = vpop.f32.mrf.mxu0
      %v1384 = vadd.f32 %v1271, %v1383
      %1385 = vmatmul.f32.gmra.mxu0 %v1322
      %v1386 = vpop.f32.mrf.mxu0
      %v1387 = vadd.f32 %v1274, %v1386
      %1388 = vmatmul.f32.gmra.mxu0 %v1325
      %v1389 = vpop.f32.mrf.mxu0
      %v1390 = vadd.f32 %v1277, %v1389
      %1391 = vmatmul.f32.gmra.mxu0 %v1328
      %v1392 = vpop.f32.mrf.mxu0
      %v1393 = vadd.f32 %v1280, %v1392
      %1394 = vmatmul.f32.gmra.mxu0 %v1331
      %v1395 = vpop.f32.mrf.mxu0
      %v1396 = vadd.f32 %v1283, %v1395
      %1397 = vmatmul.f32.gmra.mxu0 %v1334
      %v1398 = vpop.f32.mrf.mxu0
      %v1399 = vadd.f32 %v1286, %v1398
      %1400 = vmatmul.f32.gmra.mxu0 %v1337
      %v1401 = vpop.f32.mrf.mxu0
      %v1402 = vadd.f32 %v1289, %v1401
      %1403 = vmatmul.f32.gmra.mxu0 %v1340
      %v1404 = vpop.f32.mrf.mxu0
      %v1405 = vadd.f32 %v1292, %v1404
      %1406 = vmatmul.f32.gmra.mxu0 %v1343
      %v1407 = vpop.f32.mrf.mxu0
      %v1408 = vadd.f32 %v1295, %v1407
      %1409 = vmatmul.f32.gmra.mxu0 %v1346
      %v1410 = vpop.f32.mrf.mxu0
      %v1411 = vadd.f32 %v1298, %v1410
      %1412 = vmatmul.f32.gmra.mxu0 %v1349
      %v1413 = vpop.f32.mrf.mxu0
      %v1414 = vadd.f32 %v1301, %v1413
      %1415 = vmatmul.f32.gmra.mxu0 %v1352
      %v1416 = vpop.f32.mrf.mxu0
      %v1417 = vadd.f32 %v1304, %v1416
      %1418 = vmatmul.f32.gmra.mxu0 %v1355
      %v1419 = vpop.f32.mrf.mxu0
      %v1420 = vadd.f32 %v1307, %v1419
      %1421 = vmatmul.f32.gmra.mxu0 %v1358
      %v1422 = vpop.f32.mrf.mxu0
      %v1423 = vadd.f32 %v1310, %v1422
      %1424 = vmatmul.f32.gmra.mxu0 %v1361
      %v1425 = vpop.f32.mrf.mxu0
      %v1426 = vadd.f32 %v1313, %v1425
      %1427 = vmatmul.f32.gmra.mxu0 %v1364
      %v1428 = vpop.f32.mrf.mxu0
      %v1429 = vadd.f32 %v1316, %v1428
      %1430 = vdwg.mxu0
      %v1431 = vld [vmem:[%s8] sm:$0xff]
      %v1432 = vld [vmem:[%s8 + $0x8] sm:$0xff]
      %v1433 = vld [vmem:[%s8 + $0x10] sm:$0xff]
      %v1434 = vld [vmem:[%s8 + $0x18] sm:$0xff]
      %v1435 = vld [vmem:[%s8 + $0x20] sm:$0xff]
      %v1436 = vld [vmem:[%s8 + $0x28] sm:$0xff]
      %v1437 = vld [vmem:[%s8 + $0x30] sm:$0xff]
      %v1438 = vld [vmem:[%s8 + $0x38] sm:$0xff]
      %v1439 = vld [vmem:[%s8 + $0x40] sm:$0xff]
      %v1440 = vld [vmem:[%s8 + $0x48] sm:$0xff]
      %v1441 = vld [vmem:[%s8 + $0x50] sm:$0xff]
      %v1442 = vld [vmem:[%s8 + $0x58] sm:$0xff]
      %v1443 = vld [vmem:[%s8 + $0x60] sm:$0xff]
      %v1444 = vld [vmem:[%s8 + $0x68] sm:$0xff]
      %v1445 = vld [vmem:[%s8 + $0x70] sm:$0xff]
      %v1446 = vld [vmem:[%s8 + $0x78] sm:$0xff]
      %1448 = vset.pattern.permute.xlu0 0
      %1449 = vperm.xlu0 %1448, %v1431
      %v1450 = vpop.permute.xlu0 %1449
      %1453 = vset.pattern.permute.xlu0 0
      %1454 = vperm.xlu0 %1453, %v1432
      %v1455 = vpop.permute.xlu0 %1454
      %1458 = vset.pattern.permute.xlu0 0
      %1459 = vperm.xlu0 %1458, %v1433
      %v1460 = vpop.permute.xlu0 %1459
      %1463 = vset.pattern.permute.xlu0 0
      %1464 = vperm.xlu0 %1463, %v1434
      %v1465 = vpop.permute.xlu0 %1464
      %1468 = vset.pattern.permute.xlu0 0
      %1469 = vperm.xlu0 %1468, %v1435
      %v1470 = vpop.permute.xlu0 %1469
      %1473 = vset.pattern.permute.xlu0 0
      %1474 = vperm.xlu0 %1473, %v1436
      %v1475 = vpop.permute.xlu0 %1474
      %1478 = vset.pattern.permute.xlu0 0
      %1479 = vperm.xlu0 %1478, %v1437
      %v1480 = vpop.permute.xlu0 %1479
      %1483 = vset.pattern.permute.xlu0 0
      %1484 = vperm.xlu0 %1483, %v1438
      %v1485 = vpop.permute.xlu0 %1484
      %1488 = vset.pattern.permute.xlu0 0
      %1489 = vperm.xlu0 %1488, %v1439
      %v1490 = vpop.permute.xlu0 %1489
      %1493 = vset.pattern.permute.xlu0 0
      %1494 = vperm.xlu0 %1493, %v1440
      %v1495 = vpop.permute.xlu0 %1494
      %1498 = vset.pattern.permute.xlu0 0
      %1499 = vperm.xlu0 %1498, %v1441
      %v1500 = vpop.permute.xlu0 %1499
      %1503 = vset.pattern.permute.xlu0 0
      %1504 = vperm.xlu0 %1503, %v1442
      %v1505 = vpop.permute.xlu0 %1504
      %1508 = vset.pattern.permute.xlu0 0
      %1509 = vperm.xlu0 %1508, %v1443
      %v1510 = vpop.permute.xlu0 %1509
      %1513 = vset.pattern.permute.xlu0 0
      %1514 = vperm.xlu0 %1513, %v1444
      %v1515 = vpop.permute.xlu0 %1514
      %1518 = vset.pattern.permute.xlu0 0
      %1519 = vperm.xlu0 %1518, %v1445
      %v1520 = vpop.permute.xlu0 %1519
      %1523 = vset.pattern.permute.xlu0 0
      %1524 = vperm.xlu0 %1523, %v1446
      %v1525 = vpop.permute.xlu0 %1524
      %v1527 = vadd.f32 %v1384, %v1450
      %v1528 = vadd.f32 %v1387, %v1455
      %v1529 = vadd.f32 %v1390, %v1460
      %v1530 = vadd.f32 %v1393, %v1465
      %v1531 = vadd.f32 %v1396, %v1470
      %v1532 = vadd.f32 %v1399, %v1475
      %v1533 = vadd.f32 %v1402, %v1480
      %v1534 = vadd.f32 %v1405, %v1485
      %v1535 = vadd.f32 %v1408, %v1490
      %v1536 = vadd.f32 %v1411, %v1495
      %v1537 = vadd.f32 %v1414, %v1500
      %v1538 = vadd.f32 %v1417, %v1505
      %v1539 = vadd.f32 %v1420, %v1510
      %v1540 = vadd.f32 %v1423, %v1515
      %v1541 = vadd.f32 %v1426, %v1520
      %v1542 = vadd.f32 %v1429, %v1525
      %v1543 = vld [vmem:[%s9] sm:$0xff]
      %v1544 = vld [vmem:[%s9 + $0x8] sm:$0xff]
      %v1545 = vld [vmem:[%s9 + $0x10] sm:$0xff]
      %v1546 = vld [vmem:[%s9 + $0x18] sm:$0xff]
      %v1547 = vld [vmem:[%s9 + $0x20] sm:$0xff]
      %v1548 = vld [vmem:[%s9 + $0x28] sm:$0xff]
      %v1549 = vld [vmem:[%s9 + $0x30] sm:$0xff]
      %v1550 = vld [vmem:[%s9 + $0x38] sm:$0xff]
      %v1551 = vld [vmem:[%s9 + $0x40] sm:$0xff]
      %v1552 = vld [vmem:[%s9 + $0x48] sm:$0xff]
      %v1553 = vld [vmem:[%s9 + $0x50] sm:$0xff]
      %v1554 = vld [vmem:[%s9 + $0x58] sm:$0xff]
      %v1555 = vld [vmem:[%s9 + $0x60] sm:$0xff]
      %v1556 = vld [vmem:[%s9 + $0x68] sm:$0xff]
      %v1557 = vld [vmem:[%s9 + $0x70] sm:$0xff]
      %v1558 = vld [vmem:[%s9 + $0x78] sm:$0xff]
      %v1559 = vld [vmem:[%s10] sm:$0xff]
      %v1560 = vld [vmem:[%s10 + $0x8] sm:$0xff]
      %v1561 = vld [vmem:[%s10 + $0x10] sm:$0xff]
      %v1562 = vld [vmem:[%s10 + $0x18] sm:$0xff]
      %v1563 = vld [vmem:[%s10 + $0x20] sm:$0xff]
      %v1564 = vld [vmem:[%s10 + $0x28] sm:$0xff]
      %v1565 = vld [vmem:[%s10 + $0x30] sm:$0xff]
      %v1566 = vld [vmem:[%s10 + $0x38] sm:$0xff]
      %v1567 = vld [vmem:[%s10 + $0x40] sm:$0xff]
      %v1568 = vld [vmem:[%s10 + $0x48] sm:$0xff]
      %v1569 = vld [vmem:[%s10 + $0x50] sm:$0xff]
      %v1570 = vld [vmem:[%s10 + $0x58] sm:$0xff]
      %v1571 = vld [vmem:[%s10 + $0x60] sm:$0xff]
      %v1572 = vld [vmem:[%s10 + $0x68] sm:$0xff]
      %v1573 = vld [vmem:[%s10 + $0x70] sm:$0xff]
      %v1574 = vld [vmem:[%s10 + $0x78] sm:$0xff]
      %1575 = vmatpush.msra.mxu0 %v1542
      %1576 = vmatpush.msra.mxu0 %v1541
      %1577 = vmatpush.msra.mxu0 %v1540
      %1578 = vmatpush.msra.mxu0 %v1539
      %1579 = vmatpush.msra.mxu0 %v1538
      %1580 = vmatpush.msra.mxu0 %v1537
      %1581 = vmatpush.msra.mxu0 %v1536
      %1582 = vmatpush.msra.mxu0 %v1535
      %1583 = vmatpush.msra.mxu0 %v1534
      %1584 = vmatpush.msra.mxu0 %v1533
      %1585 = vmatpush.msra.mxu0 %v1532
      %1586 = vmatpush.msra.mxu0 %v1531
      %1587 = vmatpush.msra.mxu0 %v1530
      %1588 = vmatpush.msra.mxu0 %v1529
      %1589 = vmatpush.msra.mxu0 %v1528
      %1590 = vmatpush.msra.mxu0 %v1527
      %1591 = vmatmul.f32.gmra.mxu0 1.0
      %v1592 = vpop.f32.mrf.mxu0
      %v1593 = vadd.f32 0.0, %v1592
      %1594 = vdwg.mxu0
      %v1595 = vmul.f32 %v1593, 0.0078125
      %v1596 = vperm.slane %v1595, 0
      %v1597 = vsub.f32 %v1527, %v1596
      %v1598 = vsub.f32 %v1528, %v1596
      %v1599 = vsub.f32 %v1529, %v1596
      %v1600 = vsub.f32 %v1530, %v1596
      %v1601 = vsub.f32 %v1531, %v1596
      %v1602 = vsub.f32 %v1532, %v1596
      %v1603 = vsub.f32 %v1533, %v1596
      %v1604 = vsub.f32 %v1534, %v1596
      %v1605 = vsub.f32 %v1535, %v1596
      %v1606 = vsub.f32 %v1536, %v1596
      %v1607 = vsub.f32 %v1537, %v1596
      %v1608 = vsub.f32 %v1538, %v1596
      %v1609 = vsub.f32 %v1539, %v1596
      %v1610 = vsub.f32 %v1540, %v1596
      %v1611 = vsub.f32 %v1541, %v1596
      %v1612 = vsub.f32 %v1542, %v1596
      %v1613 = vmul.f32 %v1597, %v1597
      %v1614 = vmul.f32 %v1598, %v1598
      %v1615 = vmul.f32 %v1599, %v1599
      %v1616 = vmul.f32 %v1600, %v1600
      %v1617 = vmul.f32 %v1601, %v1601
      %v1618 = vmul.f32 %v1602, %v1602
      %v1619 = vmul.f32 %v1603, %v1603
      %v1620 = vmul.f32 %v1604, %v1604
      %v1621 = vmul.f32 %v1605, %v1605
      %v1622 = vmul.f32 %v1606, %v1606
      %v1623 = vmul.f32 %v1607, %v1607
      %v1624 = vmul.f32 %v1608, %v1608
      %v1625 = vmul.f32 %v1609, %v1609
      %v1626 = vmul.f32 %v1610, %v1610
      %v1627 = vmul.f32 %v1611, %v1611
      %v1628 = vmul.f32 %v1612, %v1612
      %1629 = vmatpush.msra.mxu0 %v1628
      %1630 = vmatpush.msra.mxu0 %v1627
      %1631 = vmatpush.msra.mxu0 %v1626
      %1632 = vmatpush.msra.mxu0 %v1625
      %1633 = vmatpush.msra.mxu0 %v1624
      %1634 = vmatpush.msra.mxu0 %v1623
      %1635 = vmatpush.msra.mxu0 %v1622
      %1636 = vmatpush.msra.mxu0 %v1621
      %1637 = vmatpush.msra.mxu0 %v1620
      %1638 = vmatpush.msra.mxu0 %v1619
      %1639 = vmatpush.msra.mxu0 %v1618
      %1640 = vmatpush.msra.mxu0 %v1617
      %1641 = vmatpush.msra.mxu0 %v1616
      %1642 = vmatpush.msra.mxu0 %v1615
      %1643 = vmatpush.msra.mxu0 %v1614
      %1644 = vmatpush.msra.mxu0 %v1613
      %1645 = vmatmul.f32.gmra.mxu0 1.0
      %v1646 = vpop.f32.mrf.mxu0
      %v1647 = vadd.f32 0.0, %v1646
      %1648 = vdwg.mxu0
      %v1649 = vmul.f32 %v1647, 0.0078125
      %v1650 = vadd.f32 %v1649, 1e-06
      %v1651 = vrsqrt.pop %v1650
      %v1652 = vmul.f32 %v1651, %v1650
      %v1653 = vmul.f32 %v1652, %v1651
      %v1654 = vmul.f32 0.5, %v1653
      %v1655 = vsub.f32 1.5, %v1654
      %v1656 = vmul.f32 %v1651, %v1655
      %vm1657 = vweird.f32 %v1650
      %vm1658 = vweird.f32 %v1651
      %vm1659 = vmor %vm1657, %vm1658
      %v1660 = vsel %vm1659, %v1651, %v1656
      %v1661 = vperm.slane %v1660, 0
      %v1662 = vmul.f32 %v1597, %v1661
      %v1663 = vmul.f32 %v1598, %v1661
      %v1664 = vmul.f32 %v1599, %v1661
      %v1665 = vmul.f32 %v1600, %v1661
      %v1666 = vmul.f32 %v1601, %v1661
      %v1667 = vmul.f32 %v1602, %v1661
      %v1668 = vmul.f32 %v1603, %v1661
      %v1669 = vmul.f32 %v1604, %v1661
      %v1670 = vmul.f32 %v1605, %v1661
      %v1671 = vmul.f32 %v1606, %v1661
      %v1672 = vmul.f32 %v1607, %v1661
      %v1673 = vmul.f32 %v1608, %v1661
      %v1674 = vmul.f32 %v1609, %v1661
      %v1675 = vmul.f32 %v1610, %v1661
      %v1676 = vmul.f32 %v1611, %v1661
      %v1677 = vmul.f32 %v1612, %v1661
      %1679 = vset.pattern.permute.xlu0 0
      %1680 = vperm.xlu0 %1679, %v1543
      %v1681 = vpop.permute.xlu0 %1680
      %1684 = vset.pattern.permute.xlu0 0
      %1685 = vperm.xlu0 %1684, %v1544
      %v1686 = vpop.permute.xlu0 %1685
      %1689 = vset.pattern.permute.xlu0 0
      %1690 = vperm.xlu0 %1689, %v1545
      %v1691 = vpop.permute.xlu0 %1690
      %1694 = vset.pattern.permute.xlu0 0
      %1695 = vperm.xlu0 %1694, %v1546
      %v1696 = vpop.permute.xlu0 %1695
      %1699 = vset.pattern.permute.xlu0 0
      %1700 = vperm.xlu0 %1699, %v1547
      %v1701 = vpop.permute.xlu0 %1700
      %1704 = vset.pattern.permute.xlu0 0
      %1705 = vperm.xlu0 %1704, %v1548
      %v1706 = vpop.permute.xlu0 %1705
      %1709 = vset.pattern.permute.xlu0 0
      %1710 = vperm.xlu0 %1709, %v1549
      %v1711 = vpop.permute.xlu0 %1710
      %1714 = vset.pattern.permute.xlu0 0
      %1715 = vperm.xlu0 %1714, %v1550
      %v1716 = vpop.permute.xlu0 %1715
      %1719 = vset.pattern.permute.xlu0 0
      %1720 = vperm.xlu0 %1719, %v1551
      %v1721 = vpop.permute.xlu0 %1720
      %1724 = vset.pattern.permute.xlu0 0
      %1725 = vperm.xlu0 %1724, %v1552
      %v1726 = vpop.permute.xlu0 %1725
      %1729 = vset.pattern.permute.xlu0 0
      %1730 = vperm.xlu0 %1729, %v1553
      %v1731 = vpop.permute.xlu0 %1730
      %1734 = vset.pattern.permute.xlu0 0
      %1735 = vperm.xlu0 %1734, %v1554
      %v1736 = vpop.permute.xlu0 %1735
      %1739 = vset.pattern.permute.xlu0 0
      %1740 = vperm.xlu0 %1739, %v1555
      %v1741 = vpop.permute.xlu0 %1740
      %1744 = vset.pattern.permute.xlu0 0
      %1745 = vperm.xlu0 %1744, %v1556
      %v1746 = vpop.permute.xlu0 %1745
      %1749 = vset.pattern.permute.xlu0 0
      %1750 = vperm.xlu0 %1749, %v1557
      %v1751 = vpop.permute.xlu0 %1750
      %1754 = vset.pattern.permute.xlu0 0
      %1755 = vperm.xlu0 %1754, %v1558
      %v1756 = vpop.permute.xlu0 %1755
      %v1758 = vmul.f32 %v1662, %v1681
      %v1759 = vmul.f32 %v1663, %v1686
      %v1760 = vmul.f32 %v1664, %v1691
      %v1761 = vmul.f32 %v1665, %v1696
      %v1762 = vmul.f32 %v1666, %v1701
      %v1763 = vmul.f32 %v1667, %v1706
      %v1764 = vmul.f32 %v1668, %v1711
      %v1765 = vmul.f32 %v1669, %v1716
      %v1766 = vmul.f32 %v1670, %v1721
      %v1767 = vmul.f32 %v1671, %v1726
      %v1768 = vmul.f32 %v1672, %v1731
      %v1769 = vmul.f32 %v1673, %v1736
      %v1770 = vmul.f32 %v1674, %v1741
      %v1771 = vmul.f32 %v1675, %v1746
      %v1772 = vmul.f32 %v1676, %v1751
      %v1773 = vmul.f32 %v1677, %v1756
      %1775 = vset.pattern.permute.xlu0 0
      %1776 = vperm.xlu0 %1775, %v1559
      %v1777 = vpop.permute.xlu0 %1776
      %1780 = vset.pattern.permute.xlu0 0
      %1781 = vperm.xlu0 %1780, %v1560
      %v1782 = vpop.permute.xlu0 %1781
      %1785 = vset.pattern.permute.xlu0 0
      %1786 = vperm.xlu0 %1785, %v1561
      %v1787 = vpop.permute.xlu0 %1786
      %1790 = vset.pattern.permute.xlu0 0
      %1791 = vperm.xlu0 %1790, %v1562
      %v1792 = vpop.permute.xlu0 %1791
      %1795 = vset.pattern.permute.xlu0 0
      %1796 = vperm.xlu0 %1795, %v1563
      %v1797 = vpop.permute.xlu0 %1796
      %1800 = vset.pattern.permute.xlu0 0
      %1801 = vperm.xlu0 %1800, %v1564
      %v1802 = vpop.permute.xlu0 %1801
      %1805 = vset.pattern.permute.xlu0 0
      %1806 = vperm.xlu0 %1805, %v1565
      %v1807 = vpop.permute.xlu0 %1806
      %1810 = vset.pattern.permute.xlu0 0
      %1811 = vperm.xlu0 %1810, %v1566
      %v1812 = vpop.permute.xlu0 %1811
      %1815 = vset.pattern.permute.xlu0 0
      %1816 = vperm.xlu0 %1815, %v1567
      %v1817 = vpop.permute.xlu0 %1816
      %1820 = vset.pattern.permute.xlu0 0
      %1821 = vperm.xlu0 %1820, %v1568
      %v1822 = vpop.permute.xlu0 %1821
      %1825 = vset.pattern.permute.xlu0 0
      %1826 = vperm.xlu0 %1825, %v1569
      %v1827 = vpop.permute.xlu0 %1826
      %1830 = vset.pattern.permute.xlu0 0
      %1831 = vperm.xlu0 %1830, %v1570
      %v1832 = vpop.permute.xlu0 %1831
      %1835 = vset.pattern.permute.xlu0 0
      %1836 = vperm.xlu0 %1835, %v1571
      %v1837 = vpop.permute.xlu0 %1836
      %1840 = vset.pattern.permute.xlu0 0
      %1841 = vperm.xlu0 %1840, %v1572
      %v1842 = vpop.permute.xlu0 %1841
      %1845 = vset.pattern.permute.xlu0 0
      %1846 = vperm.xlu0 %1845, %v1573
      %v1847 = vpop.permute.xlu0 %1846
      %1850 = vset.pattern.permute.xlu0 0
      %1851 = vperm.xlu0 %1850, %v1574
      %v1852 = vpop.permute.xlu0 %1851
      %v1854 = vadd.f32 %v1758, %v1777
      %v1855 = vadd.f32 %v1759, %v1782
      %v1856 = vadd.f32 %v1760, %v1787
      %v1857 = vadd.f32 %v1761, %v1792
      %v1858 = vadd.f32 %v1762, %v1797
      %v1859 = vadd.f32 %v1763, %v1802
      %v1860 = vadd.f32 %v1764, %v1807
      %v1861 = vadd.f32 %v1765, %v1812
      %v1862 = vadd.f32 %v1766, %v1817
      %v1863 = vadd.f32 %v1767, %v1822
      %v1864 = vadd.f32 %v1768, %v1827
      %v1865 = vadd.f32 %v1769, %v1832
      %v1866 = vadd.f32 %v1770, %v1837
      %v1867 = vadd.f32 %v1771, %v1842
      %v1868 = vadd.f32 %v1772, %v1847
      %v1869 = vadd.f32 %v1773, %v1852
      %v1870 = vmul.f32 %v1854, 0.5
      %v1871 = vmul.f32 %v1855, 0.5
      %v1872 = vmul.f32 %v1856, 0.5
      %v1873 = vmul.f32 %v1857, 0.5
      %v1874 = vmul.f32 %v1858, 0.5
      %v1875 = vmul.f32 %v1859, 0.5
      %v1876 = vmul.f32 %v1860, 0.5
      %v1877 = vmul.f32 %v1861, 0.5
      %v1878 = vmul.f32 %v1862, 0.5
      %v1879 = vmul.f32 %v1863, 0.5
      %v1880 = vmul.f32 %v1864, 0.5
      %v1881 = vmul.f32 %v1865, 0.5
      %v1882 = vmul.f32 %v1866, 0.5
      %v1883 = vmul.f32 %v1867, 0.5
      %v1884 = vmul.f32 %v1868, 0.5
      %v1885 = vmul.f32 %v1869, 0.5
      %v1886 = vmul.f32 %v1854, 0.044715
      %v1887 = vmul.f32 %v1855, 0.044715
      %v1888 = vmul.f32 %v1856, 0.044715
      %v1889 = vmul.f32 %v1857, 0.044715
      %v1890 = vmul.f32 %v1858, 0.044715
      %v1891 = vmul.f32 %v1859, 0.044715
      %v1892 = vmul.f32 %v1860, 0.044715
      %v1893 = vmul.f32 %v1861, 0.044715
      %v1894 = vmul.f32 %v1862, 0.044715
      %v1895 = vmul.f32 %v1863, 0.044715
      %v1896 = vmul.f32 %v1864, 0.044715
      %v1897 = vmul.f32 %v1865, 0.044715
      %v1898 = vmul.f32 %v1866, 0.044715
      %v1899 = vmul.f32 %v1867, 0.044715
      %v1900 = vmul.f32 %v1868, 0.044715
      %v1901 = vmul.f32 %v1869, 0.044715
      %v1902 = vmul.f32 %v1886, %v1854
      %v1903 = vmul.f32 %v1887, %v1855
      %v1904 = vmul.f32 %v1888, %v1856
      %v1905 = vmul.f32 %v1889, %v1857
      %v1906 = vmul.f32 %v1890, %v1858
      %v1907 = vmul.f32 %v1891, %v1859
      %v1908 = vmul.f32 %v1892, %v1860
      %v1909 = vmul.f32 %v1893, %v1861
      %v1910 = vmul.f32 %v1894, %v1862
      %v1911 = vmul.f32 %v1895, %v1863
      %v1912 = vmul.f32 %v1896, %v1864
      %v1913 = vmul.f32 %v1897, %v1865
      %v1914 = vmul.f32 %v1898, %v1866
      %v1915 = vmul.f32 %v1899, %v1867
      %v1916 = vmul.f32 %v1900, %v1868
      %v1917 = vmul.f32 %v1901, %v1869
      %v1918 = vmul.f32 %v1902, %v1854
      %v1919 = vmul.f32 %v1903, %v1855
      %v1920 = vmul.f32 %v1904, %v1856
      %v1921 = vmul.f32 %v1905, %v1857
      %v1922 = vmul.f32 %v1906, %v1858
      %v1923 = vmul.f32 %v1907, %v1859
      %v1924 = vmul.f32 %v1908, %v1860
      %v1925 = vmul.f32 %v1909, %v1861
      %v1926 = vmul.f32 %v1910, %v1862
      %v1927 = vmul.f32 %v1911, %v1863
      %v1928 = vmul.f32 %v1912, %v1864
      %v1929 = vmul.f32 %v1913, %v1865
      %v1930 = vmul.f32 %v1914, %v1866
      %v1931 = vmul.f32 %v1915, %v1867
      %v1932 = vmul.f32 %v1916, %v1868
      %v1933 = vmul.f32 %v1917, %v1869
      %v1934 = vadd.f32 %v1854, %v1918
      %v1935 = vadd.f32 %v1855, %v1919
      %v1936 = vadd.f32 %v1856, %v1920
      %v1937 = vadd.f32 %v1857, %v1921
      %v1938 = vadd.f32 %v1858, %v1922
      %v1939 = vadd.f32 %v1859, %v1923
      %v1940 = vadd.f32 %v1860, %v1924
      %v1941 = vadd.f32 %v1861, %v1925
      %v1942 = vadd.f32 %v1862, %v1926
      %v1943 = vadd.f32 %v1863, %v1927
      %v1944 = vadd.f32 %v1864, %v1928
      %v1945 = vadd.f32 %v1865, %v1929
      %v1946 = vadd.f32 %v1866, %v1930
      %v1947 = vadd.f32 %v1867, %v1931
      %v1948 = vadd.f32 %v1868, %v1932
      %v1949 = vadd.f32 %v1869, %v1933
      %v1950 = vmul.f32 %v1934, 0.7978846
      %v1951 = vmul.f32 %v1935, 0.7978846
      %v1952 = vmul.f32 %v1936, 0.7978846
      %v1953 = vmul.f32 %v1937, 0.7978846
      %v1954 = vmul.f32 %v1938, 0.7978846
      %v1955 = vmul.f32 %v1939, 0.7978846
      %v1956 = vmul.f32 %v1940, 0.7978846
      %v1957 = vmul.f32 %v1941, 0.7978846
      %v1958 = vmul.f32 %v1942, 0.7978846
      %v1959 = vmul.f32 %v1943, 0.7978846
      %v1960 = vmul.f32 %v1944, 0.7978846
      %v1961 = vmul.f32 %v1945, 0.7978846
      %v1962 = vmul.f32 %v1946, 0.7978846
      %v1963 = vmul.f32 %v1947, 0.7978846
      %v1964 = vmul.f32 %v1948, 0.7978846
      %v1965 = vmul.f32 %v1949, 0.7978846
      %v1966 = vtanh.pop %v1950
      %v1967 = vtanh.pop %v1951
      %v1968 = vtanh.pop %v1952
      %v1969 = vtanh.pop %v1953
      %v1970 = vtanh.pop %v1954
      %v1971 = vtanh.pop %v1955
      %v1972 = vtanh.pop %v1956
      %v1973 = vtanh.pop %v1957
      %v1974 = vtanh.pop %v1958
      %v1975 = vtanh.pop %v1959
      %v1976 = vtanh.pop %v1960
      %v1977 = vtanh.pop %v1961
      %v1978 = vtanh.pop %v1962
      %v1979 = vtanh.pop %v1963
      %v1980 = vtanh.pop %v1964
      %v1981 = vtanh.pop %v1965
      %v1982 = vadd.f32 %v1966, 1.0
      %v1983 = vadd.f32 %v1967, 1.0
      %v1984 = vadd.f32 %v1968, 1.0
      %v1985 = vadd.f32 %v1969, 1.0
      %v1986 = vadd.f32 %v1970, 1.0
      %v1987 = vadd.f32 %v1971, 1.0
      %v1988 = vadd.f32 %v1972, 1.0
      %v1989 = vadd.f32 %v1973, 1.0
      %v1990 = vadd.f32 %v1974, 1.0
      %v1991 = vadd.f32 %v1975, 1.0
      %v1992 = vadd.f32 %v1976, 1.0
      %v1993 = vadd.f32 %v1977, 1.0
      %v1994 = vadd.f32 %v1978, 1.0
      %v1995 = vadd.f32 %v1979, 1.0
      %v1996 = vadd.f32 %v1980, 1.0
      %v1997 = vadd.f32 %v1981, 1.0
      %v1998 = vmul.f32 %v1870, %v1982
      %v1999 = vmul.f32 %v1871, %v1983
      %v2000 = vmul.f32 %v1872, %v1984
      %v2001 = vmul.f32 %v1873, %v1985
      %v2002 = vmul.f32 %v1874, %v1986
      %v2003 = vmul.f32 %v1875, %v1987
      %v2004 = vmul.f32 %v1876, %v1988
      %v2005 = vmul.f32 %v1877, %v1989
      %v2006 = vmul.f32 %v1878, %v1990
      %v2007 = vmul.f32 %v1879, %v1991
      %v2008 = vmul.f32 %v1880, %v1992
      %v2009 = vmul.f32 %v1881, %v1993
      %v2010 = vmul.f32 %v1882, %v1994
      %v2011 = vmul.f32 %v1883, %v1995
      %v2012 = vmul.f32 %v1884, %v1996
      %v2013 = vmul.f32 %v1885, %v1997
      %2014 = vst.msk [vmem:[%s496] sm:$0xff] %vm1196, %v1998
      %2015 = vst.msk [vmem:[%s496 + $0x8] sm:$0xff] %vm1196, %v1999
      %2016 = vst.msk [vmem:[%s496 + $0x10] sm:$0xff] %vm1196, %v2000
      %2017 = vst.msk [vmem:[%s496 + $0x18] sm:$0xff] %vm1196, %v2001
      %2018 = vst.msk [vmem:[%s496 + $0x20] sm:$0xff] %vm1196, %v2002
      %2019 = vst.msk [vmem:[%s496 + $0x28] sm:$0xff] %vm1196, %v2003
      %2020 = vst.msk [vmem:[%s496 + $0x30] sm:$0xff] %vm1196, %v2004
      %2021 = vst.msk [vmem:[%s496 + $0x38] sm:$0xff] %vm1196, %v2005
      %2022 = vst.msk [vmem:[%s496 + $0x40] sm:$0xff] %vm1196, %v2006
      %2023 = vst.msk [vmem:[%s496 + $0x48] sm:$0xff] %vm1196, %v2007
      %2024 = vst.msk [vmem:[%s496 + $0x50] sm:$0xff] %vm1196, %v2008
      %2025 = vst.msk [vmem:[%s496 + $0x58] sm:$0xff] %vm1196, %v2009
      %2026 = vst.msk [vmem:[%s496 + $0x60] sm:$0xff] %vm1196, %v2010
      %2027 = vst.msk [vmem:[%s496 + $0x68] sm:$0xff] %vm1196, %v2011
      %2028 = vst.msk [vmem:[%s496 + $0x70] sm:$0xff] %vm1196, %v2012
      %2029 = vst.msk [vmem:[%s496 + $0x78] sm:$0xff] %vm1196, %v2013
      %p2030 = scmp.lt.s32.totalorder %s28, 1
      %s2031 = scalar_select %p2030, %s28, 1
      %p2032 = scmp.lt.s32.totalorder %s29, 0
      %s2033 = scalar_select %p2032, %s29, 0
      %s2034 = smul.addr %s2031, 16
      %s2035 = sadd.s32 %s2033, %s2034
      %s2036 = smul.addr %s2035, 8
      %s2037 = scalar_lea.vmem %s11, %s2036
      %p2038 = scmp.lt.s32.totalorder %s28, 1
      %s2039 = scalar_select %p2038, %s28, 1
      %p2040 = scmp.lt.s32.totalorder %s29, 0
      %s2041 = scalar_select %p2040, %s29, 0
      %s2042 = smul.addr %s2039, 16
      %s2043 = sadd.s32 %s2041, %s2042
      %s2044 = smul.addr %s2043, 8
      %s2045 = scalar_lea.vmem %s12, %s2044
      // Predicated region
      $region65: #{dcu_down_forward.1} parent=63 // pred_check
        %p2046 = pneg %p301
      $region66: #{dcu_down_forward.1} parent=63 // pred_check_branch
        %2048 = sbr.rel (%p2046) target = $region68
      $region67: #{dcu_down_forward.1} parent=63 // pred_region
        _
      $region68: #{dcu_down_forward.1} parent=63 // pred_fallthru
        _
      // Predicated region
      $region69: #{dcu_down_forward.1} parent=63 // pred_check
        %p2049 = pneg %p329
      $region70: #{dcu_down_forward.1} parent=63 // pred_check_branch
        %2051 = sbr.rel (%p2049) target = $region72
      $region71: #{dcu_down_forward.1} parent=63 // pred_region
        _
      $region72: #{dcu_down_forward.1} parent=63 // pred_fallthru
        _
    $region64: #{dcu_down_forward.1} parent=5 // pred_fallthru
      _
    %p2052 = scmp.le.s32.totalorder 2, %s19
    // Predicated region
    $region73: #{dcu_down_forward.1} parent=5 // pred_check
      %p2053 = pneg %p2052
    $region74: #{dcu_down_forward.1} parent=5 // pred_check_branch
      %2055 = sbr.rel (%p2053) target = $region76
    $region75: #{dcu_down_forward.1} parent=5 // pred_region
      %s2056 = ssub.s32 %s19, 2
      // Predicated region
      $region77: #{dcu_down_forward.1} parent=75 // pred_check
        %p2057 = pneg %p307
      $region78: #{dcu_down_forward.1} parent=75 // pred_check_branch
        %2059 = sbr.rel (%p2057) target = $region80
      $region79: #{dcu_down_forward.1} parent=75 // pred_region
        %p2060 = scmp.lt.s32.totalorder %s30, 1
        %s2061 = scalar_select %p2060, %s30, 1
        %p2062 = scmp.lt.s32.totalorder %s31, 0
        %s2063 = scalar_select %p2062, %s31, 0
        %s2064 = smul.addr %s2061, 16
        %s2065 = sadd.s32 %s2063, %s2064
        %s2066 = smul.addr %s2065, 8
        %s2067 = scalar_lea.vmem %s11, %s2066
      $region80: #{dcu_down_forward.1} parent=75 // pred_fallthru
        _
      // Predicated region
      $region81: #{dcu_down_forward.1} parent=75 // pred_check
        %p2068 = pneg %p335
      $region82: #{dcu_down_forward.1} parent=75 // pred_check_branch
        %2070 = sbr.rel (%p2068) target = $region84
      $region83: #{dcu_down_forward.1} parent=75 // pred_region
        %p2071 = scmp.lt.s32.totalorder %s30, 1
        %s2072 = scalar_select %p2071, %s30, 1
        %p2073 = scmp.lt.s32.totalorder %s31, 0
        %s2074 = scalar_select %p2073, %s31, 0
        %s2075 = smul.addr %s2072, 16
        %s2076 = sadd.s32 %s2074, %s2075
        %s2077 = smul.addr %s2076, 8
        %s2078 = scalar_lea.vmem %s12, %s2077
      $region84: #{dcu_down_forward.1} parent=75 // pred_fallthru
        _
    $region76: #{dcu_down_forward.1} parent=5 // pred_fallthru
      _
  $region6: #{dcu_down_forward.1} parent=0 // loop_footer
    %s23 = sadd.s32 1, %s19
  $region7: #{dcu_down_forward.1} parent=0 // loop_footer_branch
    %18 = sbr.rel target = $region3
  $region8: #{dcu_down_forward.1} parent=0 // loop_exit
    _

</llo_original>
